<compile_context>
chip_gen: v7x
topology: tpu7x:2x2x1
jax: 0.10.0
libtpu: 0.0.40
codegen_flags: <defaults>
</compile_context>

<pallas_src>
import functools

import jax
import jax.numpy as jnp
from jax import lax
from jax.experimental import pallas as pl
from jax.experimental.pallas import tpu as pltpu

LRELU_SLOPE = 0.2


def convblock1d_kernel(x_ref, xh_ref, b1_ref, b2_ref,
                       w1_ref, w2_ref, wr_ref, br_ref,
                       o_ref, xpad_ref, hpad_ref, *, tail, dense_out):
    """One (L-tile, batch) block per grid step; s = l * T is the tile start.

    x_ref  : (1, T, Cin)     x rows [s, s+T)                (channels-last)
    xh_ref : (1, 1, 4, Cin)  x halo rows [s-2, s-1, s+T, s+T+1] (zeros at edges)
    b1_ref : (1, T+2, Cin)   conv1 positional-bias rows [s-1, s+T] (zeros at edges)
    b2_ref : (T, Cout)       conv2 positional-bias rows [s, s+T)
    w1_ref : (3, Cin, Cin)   conv1 weight, tap-major
    w2_ref : (3, Cin, Cout)  conv2 weight, tap-major
    wr_ref : (Cin, Cout)     1x1 resize-conv weight
    br_ref : (1, Cout)       resize-conv bias
    o_ref  : (1, T, Cout)  or (1, 1, T*Cout) when dense_out
    xpad_ref : VMEM (T+4, Cin) scratch = padded x rows     [s-2, s+T+2)
    hpad_ref : VMEM (T+2, Cin) scratch = padded hidden rows [s-1, s+T+1)
    tail     : static count of trailing hpad rows that are conv zero padding
               (1 when the tiling divides L exactly; more when L was padded)
    """
    l = pl.program_id(0)
    nt = pl.num_programs(0)
    T, Cout = b2_ref.shape
    Cin = hpad_ref.shape[1]
    f32 = jnp.float32
    cdt = xpad_ref.dtype

    def lrelu(v):
        return jnp.where(v >= 0, v, LRELU_SLOPE * v)

    def dot_f32(a, w):
        return jnp.dot(a, w, preferred_element_type=f32)

    # ---- stage x tile + 2-row halos: xpad[r] = X~[s - 2 + r] ----
    # TODO(synk): an Element-indexed overlapping (T+4)-row window over a
    # 2-row-padded x in HBM would remove this T*Cin copy through the store
    # slot; kept as scratch staging here because overlapping Element windows
    # need sublane-aligned window sizes and are the riskier lowering path.
    xm = x_ref[0]                                     # (T, Cin)
    xh = xh_ref[0, 0]                                 # (4, Cin)
    xpad_ref[0:2, :] = xh[0:2]
    xpad_ref[2:T + 2, :] = xm
    xpad_ref[T + 2:T + 4, :] = xh[2:4]

    # ---- conv1 (k=3, p=1): all T+2 hidden rows (interior + halos) in 3 matmuls ----
    # TODO(synk): on v6e/v7x with Cin <= 128 an im2col (T+2, 3*Cin) slab and one
    # K=3*Cin matmul would fill the 256-wide MXU better; not done because it
    # triples the staging stores, which bind before the MXU at small/medium C.
    hpre = (dot_f32(xpad_ref[pl.ds(0, T + 2), :], w1_ref[0])
            + dot_f32(xpad_ref[pl.ds(1, T + 2), :], w1_ref[1])
            + dot_f32(xpad_ref[pl.ds(2, T + 2), :], w1_ref[2])
            + b1_ref[0].astype(f32))
    hpad_ref[...] = lrelu(hpre).astype(cdt)

    # Rows of the padded hidden activation that are conv2's zero padding:
    # row 0 of the first tile (position -1) and the trailing `tail` rows of the
    # last tile (positions >= true L, including any L-padding rows).
    @pl.when(l == 0)
    def _():
        hpad_ref[0:1, :] = jnp.zeros((1, Cin), cdt)

    @pl.when(l == nt - 1)
    def _():
        hpad_ref[T + 2 - tail:T + 2, :] = jnp.zeros((tail, Cin), cdt)

    # ---- conv2 (k=3, p=1) + positional bias ----
    y = (dot_f32(hpad_ref[pl.ds(0, T), :], w2_ref[0])
         + dot_f32(hpad_ref[pl.ds(1, T), :], w2_ref[1])
         + dot_f32(hpad_ref[pl.ds(2, T), :], w2_ref[2])
         + b2_ref[...].astype(f32))
    y = lrelu(y)

    # ---- 1x1 resize conv (skip path) straight from the input tile ----
    skip = dot_f32(xm, wr_ref[...]) + br_ref[...].astype(f32)

    val = (y + skip).astype(o_ref.dtype)
    if dense_out:
        # Lane-dense repack: unmasked full-lane output stores when Cout < 128.
        o_ref[0] = val.reshape(1, T * Cout)
    else:
        o_ref[0] = val


def _round_up(x, m):
    return ((x + m - 1) // m) * m


def _vmem_step_bytes(T, Cin, Cout, isz):
    """Rough per-grid-step VMEM footprint: double-buffered pipelined operands,
    the two scratch slabs and the f32 compute temporaries."""
    dbl = 2 * isz * (T * Cin + 4 * Cin + (T + 2) * Cin + 2 * T * Cout
                     + 3 * Cin * Cin + 3 * Cin * Cout + Cin * Cout + Cout)
    scratch = isz * ((T + 4) * Cin + (T + 2) * Cin)
    temps = 4 * ((T + 2) * Cin + 2 * T * Cout)
    return dbl + scratch + temps


def _choose_l_tile(L, l_tile, isz, Cin, Cout, vmem_budget):
    if l_tile is not None:
        if l_tile % 8 != 0:
            raise ValueError(f"l_tile={l_tile} must be a multiple of 8")
        return l_tile
    cap = 1024                          # big tiles amortize the ~0.35us/step overhead
    while cap > 16 and _vmem_step_bytes(cap, Cin, Cout, isz) > vmem_budget:
        cap //= 2
    if L <= cap:
        return _round_up(L, 16)         # 16: a full sublane vreg even for bf16
    best = 0
    for t in range(16, cap + 1, 16):    # largest exact divisor -> no L padding
        if L % t == 0:
            best = t
    if best >= cap // 2:
        return best
    return cap                          # no friendly divisor: pad L up to NT*cap


def conv_block_1d(x, params, *, l_tile=None, vmem_limit_bytes=None,
                  lane_dense_out=False, single_buffer_weights=False,
                  input_layout="NCL", output_layout="NCL"):
    """ConvBlock1d forward.

    x: (B, Cin, L) when input_layout == "NCL" (PyTorch), or (B, L, Cin) when
    input_layout == "NLC" (lets a channels-last caller skip the transposes).
    params: output of pack_params().  Returns (B, Cout, L) or (B, L, Cout).
    """
    W1, b1k, W2, b2k, Wr, brk = params
    if input_layout == "NCL":
        B, Cin, L = x.shape
        x_lc = jnp.transpose(x, (0, 2, 1))   # one HBM pass; avoidable via "NLC"
    elif input_layout == "NLC":
        B, L, Cin = x.shape
        x_lc = x
    else:
        raise ValueError(f"bad input_layout {input_layout}")
    Cout = Wr.shape[1]
    cdt = x_lc.dtype
    isz = jnp.dtype(cdt).itemsize

    budget = int(0.75 * vmem_limit_bytes) if vmem_limit_bytes else 12 * 1024 * 1024
    T = _choose_l_tile(L, l_tile, isz, Cin, Cout, budget)
    NT = -(-L // T)
    L_pad = NT * T
    tail = L_pad - L + 1                 # trailing hidden rows that are zero padding

    if L_pad != L:                       # pad L; boundary handled via `tail` masking
        pad = L_pad - L
        x_lc = jnp.pad(x_lc, ((0, 0), (0, pad), (0, 0)))
        b1k = jnp.pad(b1k, ((0, pad), (0, 0)))
        b2k = jnp.pad(b2k, ((0, pad), (0, 0)))

    # Per-tile halos / bias windows gathered once in the wrapper (zeros at the
    # sequence edges = the convs' zero padding); built from slices so x itself
    # is never copied through HBM a second time.
    xt = x_lc.reshape(B, NT, T, Cin)
    z2 = jnp.zeros((B, 1, 2, Cin), cdt)
    x_left = jnp.concatenate([z2, xt[:, :NT - 1, T - 2:, :]], axis=1)
    x_right = jnp.concatenate([xt[:, 1:, :2, :], z2], axis=1)
    xh = jnp.concatenate([x_left, x_right], axis=2)               # (B, NT, 4, Cin)

    b1t = b1k.reshape(NT, T, Cin)
    z1 = jnp.zeros((1, 1, Cin), b1k.dtype)
    b1_left = jnp.concatenate([z1, b1t[:NT - 1, T - 1:, :]], axis=0)   # rows s-1
    b1_right = jnp.concatenate([b1t[1:, :1, :], z1], axis=0)          # rows s+T
    b1w = jnp.concatenate([b1_left, b1t, b1_right], axis=1)           # (NT, T+2, Cin)

    # Constant-index operands never change block index; Buffered(1) frees their
    # second pipeline buffer (matters only for large C, so it is opt-in).
    wkw = dict(pipeline_mode=pl.Buffered(1)) if single_buffer_weights else {}

    dense = bool(lane_dense_out and Cout < 128 and (T * Cout) % 128 == 0)
    if dense:
        out_shape = jax.ShapeDtypeStruct((B, NT, T * Cout), cdt)
        out_spec = pl.BlockSpec((1, 1, T * Cout), lambda l, b: (b, l, 0))
    else:
        out_shape = jax.ShapeDtypeStruct((B, L_pad, Cout), cdt)
        out_spec = pl.BlockSpec((1, T, Cout), lambda l, b: (b, l, 0))

    flops = 2 * B * L_pad * (3 * Cin * Cin + 3 * Cin * Cout + Cin * Cout)
    bytes_accessed = isz * (B * L_pad * (Cin + Cout)          # x in, y out
                            + L_pad * (Cin + Cout)            # positional biases
                            + 3 * Cin * Cin + 4 * Cin * Cout + Cout)

    cp_kwargs = dict(dimension_semantics=("parallel", "parallel"))
    if vmem_limit_bytes is not None:
        cp_kwargs["vmem_limit_bytes"] = vmem_limit_bytes

    out = pl.pallas_call(
        functools.partial(convblock1d_kernel, tail=tail, dense_out=dense),
        out_shape=out_shape,
        grid_spec=pltpu.PrefetchScalarGridSpec(
            num_scalar_prefetch=0,
            grid=(NT, B),                 # batch innermost: bias blocks stay resident
            in_specs=[
                pl.BlockSpec((1, T, Cin), lambda l, b: (b, l, 0)),           # x tile
                pl.BlockSpec((1, 1, 4, Cin), lambda l, b: (b, l, 0, 0)),     # x halos
                pl.BlockSpec((1, T + 2, Cin), lambda l, b: (l, 0, 0)),       # b1 window
                pl.BlockSpec((T, Cout), lambda l, b: (l, 0)),                # b2 tile
                pl.BlockSpec((3, Cin, Cin), lambda l, b: (0, 0, 0), **wkw),  # W1
                pl.BlockSpec((3, Cin, Cout), lambda l, b: (0, 0, 0), **wkw), # W2
                pl.BlockSpec((Cin, Cout), lambda l, b: (0, 0), **wkw),       # Wr
                pl.BlockSpec((1, Cout), lambda l, b: (0, 0), **wkw),         # br
            ],
            out_specs=out_spec,
            scratch_shapes=[pltpu.VMEM((T + 4, Cin), cdt),
                            pltpu.VMEM((T + 2, Cin), cdt)],
        ),
        compiler_params=pltpu.CompilerParams(**cp_kwargs),
        cost_estimate=pl.CostEstimate(flops=int(flops), transcendentals=0,
                                      bytes_accessed=int(bytes_accessed)),
    )(x_lc, xh, b1w, b2k, W1, W2, Wr, brk)

    if dense:
        out = out.reshape(B, L_pad, Cout)     # free: same row-major layout
    out = out[:, :L, :]
    if output_layout == "NCL":
        return jnp.transpose(out, (0, 2, 1))  # drop by passing output_layout="NLC"
    elif output_layout == "NLC":
        return out
    raise ValueError(f"bad output_layout {output_layout}")


# ---------------- plain-JAX glue: weight-norm fold, packing, reference ----------------

def weight_norm(v, g):
    """Effective weight of nn.utils.weight_norm(..., dim=0)."""
    norm = jnp.sqrt(jnp.sum(v * v, axis=tuple(range(1, v.ndim)), keepdims=True))
    return g.reshape((-1,) + (1,) * (v.ndim - 1)) * v / norm


def pack_params(w_r, b_r, w_1, b_1, w_2, b_2):
    """PyTorch (O, I, K) weights / (O, L) biases -> kernel layout."""
    W1 = jnp.transpose(w_1, (2, 1, 0))        # (3, Cin, Cin)   tap-major
    W2 = jnp.transpose(w_2, (2, 1, 0))        # (3, Cin, Cout)
    Wr = jnp.transpose(w_r[:, :, 0], (1, 0))  # (Cin, Cout)
    b1k = jnp.transpose(b_1, (1, 0))          # (L, Cin)
    b2k = jnp.transpose(b_2, (1, 0))          # (L, Cout)
    brk = b_r.reshape(1, -1)                  # (1, Cout)
    return (W1, b1k, W2, b2k, Wr, brk)


def ref_forward(x, w_r, b_r, w_1, b_1, w_2, b_2):
    """Pure-JAX reference in PyTorch NCL layout (correctness check only)."""
    dn = lax.conv_dimension_numbers(x.shape, w_1.shape, ('NCH', 'OIH', 'NCH'))

    def conv(a, w, pad):
        return lax.conv_general_dilated(a, w, (1,), [(pad, pad)],
                                        dimension_numbers=dn)

    skip = conv(x, w_r, 0) + b_r[None, :, None]
    h = conv(x, w_1, 1) + b_1[None]
    h = jnp.where(h >= 0, h, LRELU_SLOPE * h)
    y = conv(h, w_2, 1) + b_2[None]
    y = jnp.where(y >= 0, y, LRELU_SLOPE * y)
    return y + skip


if __name__ == "__main__":
    B, Cin, Cout, L = 2, 4, 8, 64
    key = jax.random.PRNGKey(0)
    ks = jax.random.split(key, 10)

    x = jax.random.normal(ks[0], (B, Cin, L), jnp.float32)

    # Synthetic parameters (shapes from ConvBlock1d.__init__).
    v_r = 0.5 * jax.random.normal(ks[1], (Cout, Cin, 1), jnp.float32)
    g_r = 1.0 + 0.1 * jax.random.normal(ks[2], (Cout,), jnp.float32)
    b_r = 0.1 * jax.random.normal(ks[3], (Cout,), jnp.float32)
    v_1 = 0.5 * jax.random.normal(ks[4], (Cin, Cin, 3), jnp.float32)
    g_1 = 1.0 + 0.1 * jax.random.normal(ks[5], (Cin,), jnp.float32)
    b_1 = 0.1 * jax.random.normal(ks[6], (Cin, L), jnp.float32)
    v_2 = 0.5 * jax.random.normal(ks[7], (Cout, Cin, 3), jnp.float32)
    g_2 = 1.0 + 0.1 * jax.random.normal(ks[8], (Cout,), jnp.float32)
    b_2 = 0.1 * jax.random.normal(ks[9], (Cout, L), jnp.float32)

    # Fold weight norm into effective weights (PyTorch OIK layout), then pack.
    w_r = weight_norm(v_r, g_r)
    w_1 = weight_norm(v_1, g_1)
    w_2 = weight_norm(v_2, g_2)
    params = pack_params(w_r, b_r, w_1, b_1, w_2, b_2)

    ref = ref_forward(x, w_r, b_r, w_1, b_1, w_2, b_2)

    # 1) auto tile (single tile, NT = 1).
    out_1 = jax.block_until_ready(conv_block_1d(x, params))
    assert out_1.shape == (B, Cout, L)
    assert jnp.allclose(out_1, ref, atol=1e-4, rtol=1e-4), \
        f"single-tile max err {float(jnp.max(jnp.abs(out_1 - ref)))}"

    # 2) L-tiled path (4 tiles of 16 -> exercises the halo exchange).
    out_2 = jax.block_until_ready(conv_block_1d(x, params, l_tile=16))
    assert jnp.allclose(out_2, ref, atol=1e-4, rtol=1e-4), \
        f"tiled max err {float(jnp.max(jnp.abs(out_2 - ref)))}"

    # 3) tile that does not divide L (48 -> L padded to 96, output trimmed).
    out_3 = jax.block_until_ready(conv_block_1d(x, params, l_tile=48))
    assert jnp.allclose(out_3, ref, atol=1e-4, rtol=1e-4), \
        f"padded-L max err {float(jnp.max(jnp.abs(out_3 - ref)))}"

    # 4) bf16 in HBM + bf16 MXU operands (f32 accumulation / elementwise in-kernel).
    bf16 = jnp.bfloat16
    xb = x.astype(bf16)
    params_b = tuple(p.astype(bf16) for p in params)
    out_4 = jax.block_until_ready(conv_block_1d(xb, params_b, l_tile=16))
    ref_b = ref_forward(xb.astype(jnp.float32),
                        w_r.astype(bf16).astype(jnp.float32),
                        b_r.astype(bf16).astype(jnp.float32),
                        w_1.astype(bf16).astype(jnp.float32),
                        b_1.astype(bf16).astype(jnp.float32),
                        w_2.astype(bf16).astype(jnp.float32),
                        b_2.astype(bf16).astype(jnp.float32))
    assert jnp.allclose(out_4.astype(jnp.float32), ref_b, atol=1e-1, rtol=1e-1), \
        f"bf16 max err {float(jnp.max(jnp.abs(out_4.astype(jnp.float32) - ref_b)))}"

    # 5) lane-dense output packing (Cout < 128): measurement-gated optimization,
    #    the in-kernel (T,Cout)->(1,T*Cout) repack needs Mosaic shape-cast
    #    support, so tolerate a lowering failure on older toolchains; when it
    #    does lower, correctness is still asserted (outside the try).
    out_5 = None
    try:
        out_5 = jax.block_until_ready(
            conv_block_1d(x, params, l_tile=16, lane_dense_out=True))
    except Exception:
        out_5 = None
    if out_5 is not None:
        assert jnp.allclose(out_5, ref, atol=1e-4, rtol=1e-4), \
            f"lane-dense max err {float(jnp.max(jnp.abs(out_5 - ref)))}"

    print("KERNEL_OK")
</pallas_src>

<mosaic_0001>
module attributes {stable_mosaic.version = 11 : i64} {
  func.func @convblock1d_kernel(%arg0: i32, %arg1: i32, %arg2: memref<1x64x4xf32, #tpu.memory_space<vmem>>, %arg3: memref<1x1x4x4xf32, #tpu.memory_space<vmem>>, %arg4: memref<1x66x4xf32, #tpu.memory_space<vmem>>, %arg5: memref<64x8xf32, #tpu.memory_space<vmem>>, %arg6: memref<3x4x4xf32, #tpu.memory_space<vmem>>, %arg7: memref<3x4x8xf32, #tpu.memory_space<vmem>>, %arg8: memref<4x8xf32, #tpu.memory_space<vmem>>, %arg9: memref<1x8xf32, #tpu.memory_space<vmem>>, %arg10: memref<1x64x8xf32, #tpu.memory_space<vmem>>, %arg11: memref<68x4xf32, #tpu.memory_space<vmem>>, %arg12: memref<66x4xf32, #tpu.memory_space<vmem>>) attributes {dimension_semantics = [#tpu.dimension_semantics<parallel>, #tpu.dimension_semantics<parallel>], iteration_bounds = array<i64: 1, 2>, scalar_prefetch = 0 : i64, scratch_operands = 2 : i64, tpu.core_type = #tpu.core_type<tc>, window_params = [{transform_indices = @transform_0, window_bounds = array<i64: 1, 64, 4>}, {transform_indices = @transform_1, window_bounds = array<i64: 1, 1, 4, 4>}, {transform_indices = @transform_2, window_bounds = array<i64: 1, 66, 4>}, {transform_indices = @transform_3, window_bounds = array<i64: 64, 8>}, {pipeline_mode = #tpu.pipeline_mode<synchronous>, transform_indices = @transform_4, window_bounds = array<i64: 3, 4, 4>}, {pipeline_mode = #tpu.pipeline_mode<synchronous>, transform_indices = @transform_5, window_bounds = array<i64: 3, 4, 8>}, {pipeline_mode = #tpu.pipeline_mode<synchronous>, transform_indices = @transform_6, window_bounds = array<i64: 4, 8>}, {pipeline_mode = #tpu.pipeline_mode<synchronous>, transform_indices = @transform_7, window_bounds = array<i64: 1, 8>}, {transform_indices = @transform_8, window_bounds = array<i64: 1, 64, 8>}]} {
    %c0 = arith.constant 0 : index
    %c0_0 = arith.constant 0 : index
    %c0_1 = arith.constant 0 : index
    %0 = vector.load %arg2[%c0, %c0_0, %c0_1] : memref<1x64x4xf32, #tpu.memory_space<vmem>>, vector<1x64x4xf32>
    %1 = vector.shape_cast %0 : vector<1x64x4xf32> to vector<64x4xf32>
    %c0_2 = arith.constant 0 : index
    %c0_3 = arith.constant 0 : index
    %c0_4 = arith.constant 0 : index
    %c0_5 = arith.constant 0 : index
    %2 = vector.load %arg3[%c0_2, %c0_3, %c0_4, %c0_5] : memref<1x1x4x4xf32, #tpu.memory_space<vmem>>, vector<1x1x4x4xf32>
    %3 = vector.shape_cast %2 : vector<1x1x4x4xf32> to vector<4x4xf32>
    %4 = vector.extract_strided_slice %3 {offsets = [0, 0], sizes = [2, 4], strides = [1, 1]} : vector<4x4xf32> to vector<2x4xf32>
    %c0_6 = arith.constant 0 : index
    %c0_7 = arith.constant 0 : index
    %5 = vector.load %arg11[%c0_6, %c0_7] : memref<68x4xf32, #tpu.memory_space<vmem>>, vector<2x4xf32>
    tpu.vector_store %arg11[%c0_6, %c0_7], %4 {strides = array<i32>} : memref<68x4xf32, #tpu.memory_space<vmem>>, vector<2x4xf32>,
    %c2 = arith.constant 2 : index
    %c0_8 = arith.constant 0 : index
    %6 = vector.load %arg11[%c2, %c0_8] : memref<68x4xf32, #tpu.memory_space<vmem>>, vector<64x4xf32>
    tpu.vector_store %arg11[%c2, %c0_8], %1 {strides = array<i32>} : memref<68x4xf32, #tpu.memory_space<vmem>>, vector<64x4xf32>,
    %7 = vector.extract_strided_slice %3 {offsets = [2, 0], sizes = [2, 4], strides = [1, 1]} : vector<4x4xf32> to vector<2x4xf32>
    %c66 = arith.constant 66 : index
    %c0_9 = arith.constant 0 : index
    %8 = vector.load %arg11[%c66, %c0_9] : memref<68x4xf32, #tpu.memory_space<vmem>>, vector<2x4xf32>
    tpu.vector_store %arg11[%c66, %c0_9], %7 {strides = array<i32>} : memref<68x4xf32, #tpu.memory_space<vmem>>, vector<2x4xf32>,
    %c0_10 = arith.constant 0 : index
    %c0_11 = arith.constant 0 : index
    %9 = vector.load %arg11[%c0_10, %c0_11] : memref<68x4xf32, #tpu.memory_space<vmem>>, vector<66x4xf32>
    %c0_12 = arith.constant 0 : index
    %c0_13 = arith.constant 0 : index
    %c0_14 = arith.constant 0 : index
    %10 = vector.load %arg6[%c0_12, %c0_13, %c0_14] : memref<3x4x4xf32, #tpu.memory_space<vmem>>, vector<1x4x4xf32>
    %11 = vector.shape_cast %10 : vector<1x4x4xf32> to vector<4x4xf32>
    %cst = arith.constant dense<0.000000e+00> : vector<66x4xf32>
    %12 = tpu.matmul %9, %11, %cst {dimension_numbers = #tpu.dot_dimension_numbers<[1], [0], [0], [1], [0, 0, 1, 1], [], []>} : vector<66x4xf32>, vector<4x4xf32>, vector<66x4xf32> -> vector<66x4xf32>
    %c1 = arith.constant 1 : index
    %c0_15 = arith.constant 0 : index
    %13 = vector.load %arg11[%c1, %c0_15] : memref<68x4xf32, #tpu.memory_space<vmem>>, vector<66x4xf32>
    %c1_16 = arith.constant 1 : index
    %c0_17 = arith.constant 0 : index
    %c0_18 = arith.constant 0 : index
    %14 = vector.load %arg6[%c1_16, %c0_17, %c0_18] : memref<3x4x4xf32, #tpu.memory_space<vmem>>, vector<1x4x4xf32>
    %15 = vector.shape_cast %14 : vector<1x4x4xf32> to vector<4x4xf32>
    %cst_19 = arith.constant dense<0.000000e+00> : vector<66x4xf32>
    %16 = tpu.matmul %13, %15, %cst_19 {dimension_numbers = #tpu.dot_dimension_numbers<[1], [0], [0], [1], [0, 0, 1, 1], [], []>} : vector<66x4xf32>, vector<4x4xf32>, vector<66x4xf32> -> vector<66x4xf32>
    %17 = arith.addf %12, %16 : vector<66x4xf32>
    %c2_20 = arith.constant 2 : index
    %c0_21 = arith.constant 0 : index
    %18 = vector.load %arg11[%c2_20, %c0_21] : memref<68x4xf32, #tpu.memory_space<vmem>>, vector<66x4xf32>
    %c2_22 = arith.constant 2 : index
    %c0_23 = arith.constant 0 : index
    %c0_24 = arith.constant 0 : index
    %19 = vector.load %arg6[%c2_22, %c0_23, %c0_24] : memref<3x4x4xf32, #tpu.memory_space<vmem>>, vector<1x4x4xf32>
    %20 = vector.shape_cast %19 : vector<1x4x4xf32> to vector<4x4xf32>
    %cst_25 = arith.constant dense<0.000000e+00> : vector<66x4xf32>
    %21 = tpu.matmul %18, %20, %cst_25 {dimension_numbers = #tpu.dot_dimension_numbers<[1], [0], [0], [1], [0, 0, 1, 1], [], []>} : vector<66x4xf32>, vector<4x4xf32>, vector<66x4xf32> -> vector<66x4xf32>
    %22 = arith.addf %17, %21 : vector<66x4xf32>
    %c0_26 = arith.constant 0 : index
    %c0_27 = arith.constant 0 : index
    %c0_28 = arith.constant 0 : index
    %23 = vector.load %arg4[%c0_26, %c0_27, %c0_28] : memref<1x66x4xf32, #tpu.memory_space<vmem>>, vector<1x66x4xf32>
    %24 = vector.shape_cast %23 : vector<1x66x4xf32> to vector<66x4xf32>
    %25 = arith.addf %22, %24 : vector<66x4xf32>
    %cst_29 = arith.constant 0.000000e+00 : f32
    %26 = vector.broadcast %cst_29 : f32 to vector<66x4xf32>
    %27 = arith.cmpf oge, %25, %26 : vector<66x4xf32>
    %cst_30 = arith.constant 2.000000e-01 : f32
    %28 = vector.broadcast %cst_30 : f32 to vector<66x4xf32>
    %29 = arith.mulf %28, %25 : vector<66x4xf32>
    %30 = arith.select %27, %25, %29 : vector<66x4xi1>, vector<66x4xf32>
    %c0_31 = arith.constant 0 : index
    %c0_32 = arith.constant 0 : index
    %31 = vector.load %arg12[%c0_31, %c0_32] : memref<66x4xf32, #tpu.memory_space<vmem>>, vector<66x4xf32>
    tpu.vector_store %arg12[%c0_31, %c0_32], %30 {strides = array<i32>} : memref<66x4xf32, #tpu.memory_space<vmem>>, vector<66x4xf32>,
    %c0_i32 = arith.constant 0 : i32
    %32 = arith.cmpi eq, %arg0, %c0_i32 : i32
    %33 = arith.extui %32 : i1 to i32
    %c0_i32_33 = arith.constant 0 : i32
    %34 = arith.cmpi ne, %33, %c0_i32_33 : i32
    scf.if %34 {
      %cst_66 = arith.constant 0.000000e+00 : f32
      %68 = vector.broadcast %cst_66 : f32 to vector<1x4xf32>
      %c0_67 = arith.constant 0 : index
      %c0_68 = arith.constant 0 : index
      %69 = vector.load %arg12[%c0_67, %c0_68] : memref<66x4xf32, #tpu.memory_space<vmem>>, vector<1x4xf32>
      tpu.vector_store %arg12[%c0_67, %c0_68], %68 {strides = array<i32>} : memref<66x4xf32, #tpu.memory_space<vmem>>, vector<1x4xf32>,
    } else {
    }
    %c0_i32_34 = arith.constant 0 : i32
    %35 = arith.cmpi eq, %arg0, %c0_i32_34 : i32
    %36 = arith.extui %35 : i1 to i32
    %c0_i32_35 = arith.constant 0 : i32
    %37 = arith.cmpi ne, %36, %c0_i32_35 : i32
    scf.if %37 {
      %cst_66 = arith.constant 0.000000e+00 : f32
      %68 = vector.broadcast %cst_66 : f32 to vector<1x4xf32>
      %c65 = arith.constant 65 : index
      %c0_67 = arith.constant 0 : index
      %69 = vector.load %arg12[%c65, %c0_67] : memref<66x4xf32, #tpu.memory_space<vmem>>, vector<1x4xf32>
      tpu.vector_store %arg12[%c65, %c0_67], %68 {strides = array<i32>} : memref<66x4xf32, #tpu.memory_space<vmem>>, vector<1x4xf32>,
    } else {
    }
    %c0_36 = arith.constant 0 : index
    %c0_37 = arith.constant 0 : index
    %38 = vector.load %arg12[%c0_36, %c0_37] : memref<66x4xf32, #tpu.memory_space<vmem>>, vector<64x4xf32>
    %c0_38 = arith.constant 0 : index
    %c0_39 = arith.constant 0 : index
    %c0_40 = arith.constant 0 : index
    %39 = vector.load %arg7[%c0_38, %c0_39, %c0_40] : memref<3x4x8xf32, #tpu.memory_space<vmem>>, vector<1x4x8xf32>
    %40 = vector.shape_cast %39 : vector<1x4x8xf32> to vector<4x8xf32>
    %cst_41 = arith.constant dense<0.000000e+00> : vector<64x8xf32>
    %41 = tpu.matmul %38, %40, %cst_41 {dimension_numbers = #tpu.dot_dimension_numbers<[1], [0], [0], [1], [0, 0, 1, 1], [], []>} : vector<64x4xf32>, vector<4x8xf32>, vector<64x8xf32> -> vector<64x8xf32>
    %c1_42 = arith.constant 1 : index
    %c0_43 = arith.constant 0 : index
    %42 = vector.load %arg12[%c1_42, %c0_43] : memref<66x4xf32, #tpu.memory_space<vmem>>, vector<64x4xf32>
    %c1_44 = arith.constant 1 : index
    %c0_45 = arith.constant 0 : index
    %c0_46 = arith.constant 0 : index
    %43 = vector.load %arg7[%c1_44, %c0_45, %c0_46] : memref<3x4x8xf32, #tpu.memory_space<vmem>>, vector<1x4x8xf32>
    %44 = vector.shape_cast %43 : vector<1x4x8xf32> to vector<4x8xf32>
    %cst_47 = arith.constant dense<0.000000e+00> : vector<64x8xf32>
    %45 = tpu.matmul %42, %44, %cst_47 {dimension_numbers = #tpu.dot_dimension_numbers<[1], [0], [0], [1], [0, 0, 1, 1], [], []>} : vector<64x4xf32>, vector<4x8xf32>, vector<64x8xf32> -> vector<64x8xf32>
    %46 = arith.addf %41, %45 : vector<64x8xf32>
    %c2_48 = arith.constant 2 : index
    %c0_49 = arith.constant 0 : index
    %47 = vector.load %arg12[%c2_48, %c0_49] : memref<66x4xf32, #tpu.memory_space<vmem>>, vector<64x4xf32>
    %c2_50 = arith.constant 2 : index
    %c0_51 = arith.constant 0 : index
    %c0_52 = arith.constant 0 : index
    %48 = vector.load %arg7[%c2_50, %c0_51, %c0_52] : memref<3x4x8xf32, #tpu.memory_space<vmem>>, vector<1x4x8xf32>
    %49 = vector.shape_cast %48 : vector<1x4x8xf32> to vector<4x8xf32>
    %cst_53 = arith.constant dense<0.000000e+00> : vector<64x8xf32>
    %50 = tpu.matmul %47, %49, %cst_53 {dimension_numbers = #tpu.dot_dimension_numbers<[1], [0], [0], [1], [0, 0, 1, 1], [], []>} : vector<64x4xf32>, vector<4x8xf32>, vector<64x8xf32> -> vector<64x8xf32>
    %51 = arith.addf %46, %50 : vector<64x8xf32>
    %c0_54 = arith.constant 0 : index
    %c0_55 = arith.constant 0 : index
    %52 = vector.load %arg5[%c0_54, %c0_55] : memref<64x8xf32, #tpu.memory_space<vmem>>, vector<64x8xf32>
    %53 = arith.addf %51, %52 : vector<64x8xf32>
    %cst_56 = arith.constant 0.000000e+00 : f32
    %54 = vector.broadcast %cst_56 : f32 to vector<64x8xf32>
    %55 = arith.cmpf oge, %53, %54 : vector<64x8xf32>
    %cst_57 = arith.constant 2.000000e-01 : f32
    %56 = vector.broadcast %cst_57 : f32 to vector<64x8xf32>
    %57 = arith.mulf %56, %53 : vector<64x8xf32>
    %58 = arith.select %55, %53, %57 : vector<64x8xi1>, vector<64x8xf32>
    %c0_58 = arith.constant 0 : index
    %c0_59 = arith.constant 0 : index
    %59 = vector.load %arg8[%c0_58, %c0_59] : memref<4x8xf32, #tpu.memory_space<vmem>>, vector<4x8xf32>
    %cst_60 = arith.constant dense<0.000000e+00> : vector<64x8xf32>
    %60 = tpu.matmul %1, %59, %cst_60 {dimension_numbers = #tpu.dot_dimension_numbers<[1], [0], [0], [1], [0, 0, 1, 1], [], []>} : vector<64x4xf32>, vector<4x8xf32>, vector<64x8xf32> -> vector<64x8xf32>
    %c0_61 = arith.constant 0 : index
    %c0_62 = arith.constant 0 : index
    %61 = vector.load %arg9[%c0_61, %c0_62] : memref<1x8xf32, #tpu.memory_space<vmem>>, vector<1x8xf32>
    %62 = vector.broadcast %61 : vector<1x8xf32> to vector<64x8xf32>
    %63 = arith.addf %60, %62 : vector<64x8xf32>
    %64 = arith.addf %58, %63 : vector<64x8xf32>
    %c0_63 = arith.constant 0 : index
    %c0_64 = arith.constant 0 : index
    %c0_65 = arith.constant 0 : index
    %65 = vector.load %arg10[%c0_63, %c0_64, %c0_65] : memref<1x64x8xf32, #tpu.memory_space<vmem>>, vector<1x64x8xf32>
    %66 = vector.shape_cast %65 : vector<1x64x8xf32> to vector<64x8xf32>
    %67 = vector.shape_cast %64 : vector<64x8xf32> to vector<1x64x8xf32>
    tpu.vector_store %arg10[%c0_63, %c0_64, %c0_65], %67 {strides = array<i32>} : memref<1x64x8xf32, #tpu.memory_space<vmem>>, vector<1x64x8xf32>,
    return
  }
  func.func @transform_0(%arg0: i32, %arg1: i32) -> (i32, i32, i32) {
    %c0_i32 = arith.constant 0 : i32
    %c0_i32_0 = arith.constant 0 : i32
    return %arg1, %arg0, %c0_i32 : i32, i32, i32
  }
  func.func @transform_1(%arg0: i32, %arg1: i32) -> (i32, i32, i32, i32) {
    %c0_i32 = arith.constant 0 : i32
    %c0_i32_0 = arith.constant 0 : i32
    %c0_i32_1 = arith.constant 0 : i32
    return %arg1, %arg0, %c0_i32, %c0_i32_0 : i32, i32, i32, i32
  }
  func.func @transform_2(%arg0: i32, %arg1: i32) -> (i32, i32, i32) {
    %c0_i32 = arith.constant 0 : i32
    %c0_i32_0 = arith.constant 0 : i32
    %c0_i32_1 = arith.constant 0 : i32
    return %arg0, %c0_i32, %c0_i32_0 : i32, i32, i32
  }
  func.func @transform_3(%arg0: i32, %arg1: i32) -> (i32, i32) {
    %c0_i32 = arith.constant 0 : i32
    %c0_i32_0 = arith.constant 0 : i32
    return %arg0, %c0_i32 : i32, i32
  }
  func.func @transform_4(%arg0: i32, %arg1: i32) -> (i32, i32, i32) {
    %c0_i32 = arith.constant 0 : i32
    %c0_i32_0 = arith.constant 0 : i32
    %c0_i32_1 = arith.constant 0 : i32
    %c0_i32_2 = arith.constant 0 : i32
    return %c0_i32, %c0_i32_0, %c0_i32_1 : i32, i32, i32
  }
  func.func @transform_5(%arg0: i32, %arg1: i32) -> (i32, i32, i32) {
    %c0_i32 = arith.constant 0 : i32
    %c0_i32_0 = arith.constant 0 : i32
    %c0_i32_1 = arith.constant 0 : i32
    %c0_i32_2 = arith.constant 0 : i32
    return %c0_i32, %c0_i32_0, %c0_i32_1 : i32, i32, i32
  }
  func.func @transform_6(%arg0: i32, %arg1: i32) -> (i32, i32) {
    %c0_i32 = arith.constant 0 : i32
    %c0_i32_0 = arith.constant 0 : i32
    %c0_i32_1 = arith.constant 0 : i32
    return %c0_i32, %c0_i32_0 : i32, i32
  }
  func.func @transform_7(%arg0: i32, %arg1: i32) -> (i32, i32) {
    %c0_i32 = arith.constant 0 : i32
    %c0_i32_0 = arith.constant 0 : i32
    %c0_i32_1 = arith.constant 0 : i32
    return %c0_i32, %c0_i32_0 : i32, i32
  }
  func.func @transform_8(%arg0: i32, %arg1: i32) -> (i32, i32, i32) {
    %c0_i32 = arith.constant 0 : i32
    %c0_i32_0 = arith.constant 0 : i32
    return %arg1, %arg0, %c0_i32 : i32, i32, i32
  }
}

</mosaic_0001>

<llo_original>
// kernel: tpu_custom_call.1
$region0: #{tpu_custom_call.1}
  #allocation0 [shape = 'u32[]', space=smem, size = 0x4, offset = 0x4, fixed_abs, tag = 'smem constant byte address 0x4 - core index']
  #allocation1 [shape = 'u32[144,128]{1,0:T(1,128)}', space=vmem, size = 0x12000, scoped, tag = 'internal scratch']
  #allocation2 [shape = 'f32[68,4]{1,0:T(8,128)}', space=vmem, size = 0x9000, scoped, tag = 'scratch operand']
  #allocation3 [shape = 'f32[66,4]{1,0:T(8,128)}', space=vmem, size = 0x9000, scoped, tag = 'scratch operand']
  %s0 = inlined_call_operand.vmem [shape: f32[2,64,4], index: 0, kind: input, shape index: {}]
  %s1 = inlined_call_operand.vmem [shape: f32[2,1,4,4], index: 1, kind: input, shape index: {}]
  %s2 = inlined_call_operand.vmem [shape: f32[1,66,4], index: 2, kind: input, shape index: {}]
  %s3 = inlined_call_operand.vmem [shape: f32[64,8], index: 3, kind: input, shape index: {}]
  %s4 = inlined_call_operand.vmem [shape: f32[3,4,4], index: 4, kind: input, shape index: {}]
  %s5 = inlined_call_operand.vmem [shape: f32[3,4,8], index: 5, kind: input, shape index: {}]
  %s6 = inlined_call_operand.vmem [shape: f32[4,8], index: 6, kind: input, shape index: {}]
  %s7 = inlined_call_operand.vmem [shape: f32[1,8], index: 7, kind: input, shape index: {}]
  %s8 = inlined_call_operand.vmem [shape: f32[2,64,8], index: 8, kind: output, shape index: {}]
  %s9 = sld [smem:[#allocation0]]
  $region69: #{tpu_custom_call.1} parent=0
    _
  %s11 = ssub.s32 1, %s9
  %s12 = scalar_select 0, %s11, %s9
  loop: start=0, step=1, limit=4
  $region2: #{tpu_custom_call.1} parent=0 // loop_pre_header
    _
  $region3: #{tpu_custom_call.1} parent=0 // loop_header
    %s14 = sphi 0, %s18
    %p15 = scmp.ge.s32.totalorder %s14, 4
    %s21 = sphi 0, %s33
    %s22 = sphi 0, %s29
    %s23 = sphi 0, %s21
    %s24 = sphi 0, %s22
    %s25 = sphi 0, %s23
    %s26 = sphi 0, %s24
    %s38 = sphi 0, %s40
    %s41 = sphi 0, %s38
    %s42 = sphi 0, %s41
    %s58 = sphi 0, %s42
    %s66 = sphi 0, %s68
    %s69 = sphi 0, %s66
    %s70 = sphi 0, %s69
    %s86 = sphi 0, %s70
    %s92 = sphi 0, %s94
    %s95 = sphi 0, %s92
    %s96 = sphi 0, %s95
    %s112 = sphi 0, %s96
    %s118 = sphi 0, %s120
    %s121 = sphi 0, %s118
    %s122 = sphi 0, %s121
    %s138 = sphi 0, %s122
    %s142 = sphi 0, %s142
    %s144 = sphi 0, %s142
    %s145 = sphi 0, %s144
    %s159 = sphi 0, %s145
    %s163 = sphi 0, %s163
    %s165 = sphi 0, %s163
    %s166 = sphi 0, %s165
    %s180 = sphi 0, %s166
    %s184 = sphi 0, %s184
    %s186 = sphi 0, %s184
    %s187 = sphi 0, %s186
    %s201 = sphi 0, %s187
    %s205 = sphi 0, %s205
    %s207 = sphi 0, %s205
    %s208 = sphi 0, %s207
    %s222 = sphi 0, %s208
    %s230 = sphi 0, %s232
    %s233 = sphi 0, %s230
    %s234 = sphi 0, %s233
    %s250 = sphi 0, %s234
  $region4: #{tpu_custom_call.1} parent=0 // loop_header_branch
    %17 = sbr.rel (%p15) target = $region8
  $region5: #{tpu_custom_call.1} parent=0 // loop_body
    %s19 = ssub.s32 %s14, 1
    %s20 = ssub.s32 %s14, 2
    %s27 = sadd.s32 1, %s22
    %p28 = scmp.ge.s32.totalorder %s27, 2
    %s29 = scalar_select %p28, 0, %s27
    %s30 = sadd.s32 1, %s21
    %s31 = scalar_select %p28, %s30, %s21
    %p32 = scmp.ge.s32.totalorder %s31, 1
    %s33 = scalar_select %p32, 0, %s31
    %s34 = ssub.s32 %s22, %s29
    %s35 = ssub.s32 %s21, %s33
    %s36 = sor.u32 %s34, %s35
    %p37 = scmp.eq.s32.totalorder %s36, 0
    %s39 = sadd.s32 %s38, 1
    %s40 = scalar_select %p37, %s38, %s39
    %p43 = pneg %p37
    %p44 = scmp.eq.s32.totalorder %s14, 1
    %p45 = por %p43, %p44
    %p46 = scmp.ne.s32.totalorder %s38, %s41
    %p47 = scmp.eq.s32.totalorder %s14, 0
    %p48 = por %p46, %p47
    %p49 = scmp.ne.s32.totalorder %s38, %s41
    %p50 = scmp.eq.s32.totalorder %s19, 1
    %p51 = por %p49, %p50
    %p52 = scmp.ne.s32.totalorder %s41, %s42
    %p53 = scmp.eq.s32.totalorder %s19, 0
    %p54 = por %p52, %p53
    %p55 = scmp.ne.s32.totalorder %s41, %s42
    %p56 = scmp.eq.s32.totalorder %s20, 1
    %p57 = por %p55, %p56
    %p59 = scmp.ne.s32.totalorder %s42, %s58
    %p60 = scmp.eq.s32.totalorder %s20, 0
    %p61 = por %p59, %p60
    %s62 = ssub.s32 %s22, %s29
    %s63 = ssub.s32 %s21, %s33
    %s64 = sor.u32 %s62, %s63
    %p65 = scmp.eq.s32.totalorder %s64, 0
    %s67 = sadd.s32 %s66, 1
    %s68 = scalar_select %p65, %s66, %s67
    %p71 = pneg %p65
    %p72 = scmp.eq.s32.totalorder %s14, 1
    %p73 = por %p71, %p72
    %p74 = scmp.ne.s32.totalorder %s66, %s69
    %p75 = scmp.eq.s32.totalorder %s14, 0
    %p76 = por %p74, %p75
    %p77 = scmp.ne.s32.totalorder %s66, %s69
    %p78 = scmp.eq.s32.totalorder %s19, 1
    %p79 = por %p77, %p78
    %p80 = scmp.ne.s32.totalorder %s69, %s70
    %p81 = scmp.eq.s32.totalorder %s19, 0
    %p82 = por %p80, %p81
    %p83 = scmp.ne.s32.totalorder %s69, %s70
    %p84 = scmp.eq.s32.totalorder %s20, 1
    %p85 = por %p83, %p84
    %p87 = scmp.ne.s32.totalorder %s70, %s86
    %p88 = scmp.eq.s32.totalorder %s20, 0
    %p89 = por %p87, %p88
    %s90 = ssub.s32 %s21, %s33
    %p91 = scmp.eq.s32.totalorder %s90, 0
    %s93 = sadd.s32 %s92, 1
    %s94 = scalar_select %p91, %s92, %s93
    %p97 = pneg %p91
    %p98 = scmp.eq.s32.totalorder %s14, 1
    %p99 = por %p97, %p98
    %p100 = scmp.ne.s32.totalorder %s92, %s95
    %p101 = scmp.eq.s32.totalorder %s14, 0
    %p102 = por %p100, %p101
    %p103 = scmp.ne.s32.totalorder %s92, %s95
    %p104 = scmp.eq.s32.totalorder %s19, 1
    %p105 = por %p103, %p104
    %p106 = scmp.ne.s32.totalorder %s95, %s96
    %p107 = scmp.eq.s32.totalorder %s19, 0
    %p108 = por %p106, %p107
    %p109 = scmp.ne.s32.totalorder %s95, %s96
    %p110 = scmp.eq.s32.totalorder %s20, 1
    %p111 = por %p109, %p110
    %p113 = scmp.ne.s32.totalorder %s96, %s112
    %p114 = scmp.eq.s32.totalorder %s20, 0
    %p115 = por %p113, %p114
    %s116 = ssub.s32 %s21, %s33
    %p117 = scmp.eq.s32.totalorder %s116, 0
    %s119 = sadd.s32 %s118, 1
    %s120 = scalar_select %p117, %s118, %s119
    %p123 = pneg %p117
    %p124 = scmp.eq.s32.totalorder %s14, 1
    %p125 = por %p123, %p124
    %p126 = scmp.ne.s32.totalorder %s118, %s121
    %p127 = scmp.eq.s32.totalorder %s14, 0
    %p128 = por %p126, %p127
    %p129 = scmp.ne.s32.totalorder %s118, %s121
    %p130 = scmp.eq.s32.totalorder %s19, 1
    %p131 = por %p129, %p130
    %p132 = scmp.ne.s32.totalorder %s121, %s122
    %p133 = scmp.eq.s32.totalorder %s19, 0
    %p134 = por %p132, %p133
    %p135 = scmp.ne.s32.totalorder %s121, %s122
    %p136 = scmp.eq.s32.totalorder %s20, 1
    %p137 = por %p135, %p136
    %p139 = scmp.ne.s32.totalorder %s122, %s138
    %p140 = scmp.eq.s32.totalorder %s20, 0
    %p141 = por %p139, %p140
    %s143 = sadd.s32 %s142, 1
    %p146 = scmp.eq.s32.totalorder %s14, 1
    %p147 = scmp.ne.s32.totalorder %s142, %s144
    %p148 = scmp.eq.s32.totalorder %s14, 0
    %p149 = por %p147, %p148
    %p150 = scmp.ne.s32.totalorder %s142, %s144
    %p151 = scmp.eq.s32.totalorder %s19, 1
    %p152 = por %p150, %p151
    %p153 = scmp.ne.s32.totalorder %s144, %s145
    %p154 = scmp.eq.s32.totalorder %s19, 0
    %p155 = por %p153, %p154
    %p156 = scmp.ne.s32.totalorder %s144, %s145
    %p157 = scmp.eq.s32.totalorder %s20, 1
    %p158 = por %p156, %p157
    %p160 = scmp.ne.s32.totalorder %s145, %s159
    %p161 = scmp.eq.s32.totalorder %s20, 0
    %p162 = por %p160, %p161
    %s164 = sadd.s32 %s163, 1
    %p167 = scmp.eq.s32.totalorder %s14, 1
    %p168 = scmp.ne.s32.totalorder %s163, %s165
    %p169 = scmp.eq.s32.totalorder %s14, 0
    %p170 = por %p168, %p169
    %p171 = scmp.ne.s32.totalorder %s163, %s165
    %p172 = scmp.eq.s32.totalorder %s19, 1
    %p173 = por %p171, %p172
    %p174 = scmp.ne.s32.totalorder %s165, %s166
    %p175 = scmp.eq.s32.totalorder %s19, 0
    %p176 = por %p174, %p175
    %p177 = scmp.ne.s32.totalorder %s165, %s166
    %p178 = scmp.eq.s32.totalorder %s20, 1
    %p179 = por %p177, %p178
    %p181 = scmp.ne.s32.totalorder %s166, %s180
    %p182 = scmp.eq.s32.totalorder %s20, 0
    %p183 = por %p181, %p182
    %s185 = sadd.s32 %s184, 1
    %p188 = scmp.eq.s32.totalorder %s14, 1
    %p189 = scmp.ne.s32.totalorder %s184, %s186
    %p190 = scmp.eq.s32.totalorder %s14, 0
    %p191 = por %p189, %p190
    %p192 = scmp.ne.s32.totalorder %s184, %s186
    %p193 = scmp.eq.s32.totalorder %s19, 1
    %p194 = por %p192, %p193
    %p195 = scmp.ne.s32.totalorder %s186, %s187
    %p196 = scmp.eq.s32.totalorder %s19, 0
    %p197 = por %p195, %p196
    %p198 = scmp.ne.s32.totalorder %s186, %s187
    %p199 = scmp.eq.s32.totalorder %s20, 1
    %p200 = por %p198, %p199
    %p202 = scmp.ne.s32.totalorder %s187, %s201
    %p203 = scmp.eq.s32.totalorder %s20, 0
    %p204 = por %p202, %p203
    %s206 = sadd.s32 %s205, 1
    %p209 = scmp.eq.s32.totalorder %s14, 1
    %p210 = scmp.ne.s32.totalorder %s205, %s207
    %p211 = scmp.eq.s32.totalorder %s14, 0
    %p212 = por %p210, %p211
    %p213 = scmp.ne.s32.totalorder %s205, %s207
    %p214 = scmp.eq.s32.totalorder %s19, 1
    %p215 = por %p213, %p214
    %p216 = scmp.ne.s32.totalorder %s207, %s208
    %p217 = scmp.eq.s32.totalorder %s19, 0
    %p218 = por %p216, %p217
    %p219 = scmp.ne.s32.totalorder %s207, %s208
    %p220 = scmp.eq.s32.totalorder %s20, 1
    %p221 = por %p219, %p220
    %p223 = scmp.ne.s32.totalorder %s208, %s222
    %p224 = scmp.eq.s32.totalorder %s20, 0
    %p225 = por %p223, %p224
    %s226 = ssub.s32 %s22, %s29
    %s227 = ssub.s32 %s21, %s33
    %s228 = sor.u32 %s226, %s227
    %p229 = scmp.eq.s32.totalorder %s228, 0
    %s231 = sadd.s32 %s230, 1
    %s232 = scalar_select %p229, %s230, %s231
    %p235 = pneg %p229
    %p236 = scmp.eq.s32.totalorder %s14, 1
    %p237 = por %p235, %p236
    %p238 = scmp.ne.s32.totalorder %s230, %s233
    %p239 = scmp.eq.s32.totalorder %s14, 0
    %p240 = por %p238, %p239
    %p241 = scmp.ne.s32.totalorder %s230, %s233
    %p242 = scmp.eq.s32.totalorder %s19, 1
    %p243 = por %p241, %p242
    %p244 = scmp.ne.s32.totalorder %s233, %s234
    %p245 = scmp.eq.s32.totalorder %s19, 0
    %p246 = por %p244, %p245
    %p247 = scmp.ne.s32.totalorder %s233, %s234
    %p248 = scmp.eq.s32.totalorder %s20, 1
    %p249 = por %p247, %p248
    %p251 = scmp.ne.s32.totalorder %s234, %s250
    %p252 = scmp.eq.s32.totalorder %s20, 0
    %p253 = por %p251, %p252
    %p254 = scmp.le.s32.totalorder 1, %s14
    %p255 = scmp.lt.s32.totalorder %s14, 3
    %p256 = pnand %p254, %p255
    %p257 = pneg %p256
    // Predicated region
    $region9: #{tpu_custom_call.1} parent=5 // pred_check
      _
    $region10: #{tpu_custom_call.1} parent=5 // pred_check_branch
      %259 = sbr.rel (%p256) target = $region12
    $region11: #{tpu_custom_call.1} parent=5 // pred_region
      %s260 = ssub.s32 %s14, 1
      // Predicated region
      $region13: #{tpu_custom_call.1} parent=11 // pred_check
        %p261 = pneg %p108
      $region14: #{tpu_custom_call.1} parent=11 // pred_check_branch
        %263 = sbr.rel (%p261) target = $region16
      $region15: #{tpu_custom_call.1} parent=11 // pred_region
        %p264 = scmp.lt.s32.totalorder %s23, 0
        %s265 = scalar_select %p264, %s23, 0
        %s266 = smul.addr %s265, 9
        %s267 = smul.addr %s266, 8
        %s268 = scalar_lea.vmem %s2, %s267
      $region16: #{tpu_custom_call.1} parent=11 // pred_fallthru
        _
      // Predicated region
      $region17: #{tpu_custom_call.1} parent=11 // pred_check
        %p269 = pneg %p134
      $region18: #{tpu_custom_call.1} parent=11 // pred_check_branch
        %271 = sbr.rel (%p269) target = $region20
      $region19: #{tpu_custom_call.1} parent=11 // pred_region
        %s272 = smul.u32 8, %s23
        %p273 = scmp.lt.s32.totalorder %s272, 7
        %s274 = scalar_select %p273, %s272, 7
        %s275 = smul.addr %s274, 8
        %s276 = scalar_lea.vmem %s3, %s275
        %s277 = smul.u32 8, %s23
      $region20: #{tpu_custom_call.1} parent=11 // pred_fallthru
        _
      // Predicated region
      $region21: #{tpu_custom_call.1} parent=11 // pred_check
        %p278 = pneg %p155
      $region22: #{tpu_custom_call.1} parent=11 // pred_check_branch
        %280 = sbr.rel (%p278) target = $region24
      $region23: #{tpu_custom_call.1} parent=11 // pred_region
        _
      $region24: #{tpu_custom_call.1} parent=11 // pred_fallthru
        _
      // Predicated region
      $region25: #{tpu_custom_call.1} parent=11 // pred_check
        %p281 = pneg %p176
      $region26: #{tpu_custom_call.1} parent=11 // pred_check_branch
        %283 = sbr.rel (%p281) target = $region28
      $region27: #{tpu_custom_call.1} parent=11 // pred_region
        _
      $region28: #{tpu_custom_call.1} parent=11 // pred_fallthru
        _
      // Predicated region
      $region29: #{tpu_custom_call.1} parent=11 // pred_check
        %p284 = pneg %p197
      $region30: #{tpu_custom_call.1} parent=11 // pred_check_branch
        %286 = sbr.rel (%p284) target = $region32
      $region31: #{tpu_custom_call.1} parent=11 // pred_region
        _
      $region32: #{tpu_custom_call.1} parent=11 // pred_fallthru
        _
      // Predicated region
      $region33: #{tpu_custom_call.1} parent=11 // pred_check
        %p287 = pneg %p218
      $region34: #{tpu_custom_call.1} parent=11 // pred_check_branch
        %289 = sbr.rel (%p287) target = $region36
      $region35: #{tpu_custom_call.1} parent=11 // pred_region
        _
      $region36: #{tpu_custom_call.1} parent=11 // pred_fallthru
        _
    $region12: #{tpu_custom_call.1} parent=5 // pred_fallthru
      _
    %p290 = scmp.lt.s32.totalorder %s14, 2
    // Predicated region
    $region37: #{tpu_custom_call.1} parent=5 // pred_check
      %p291 = pneg %p290
    $region38: #{tpu_custom_call.1} parent=5 // pred_check_branch
      %293 = sbr.rel (%p291) target = $region40
    $region39: #{tpu_custom_call.1} parent=5 // pred_region
      // Predicated region
      $region41: #{tpu_custom_call.1} parent=39 // pred_check
        %p294 = pneg %p48
      $region42: #{tpu_custom_call.1} parent=39 // pred_check_branch
        %296 = sbr.rel (%p294) target = $region44
      $region43: #{tpu_custom_call.1} parent=39 // pred_region
        %s297 = smul.u32 8, %s21
        %p298 = scmp.lt.s32.totalorder %s22, 1
        %s299 = scalar_select %p298, %s22, 1
        %p300 = scmp.lt.s32.totalorder %s297, 7
        %s301 = scalar_select %p300, %s297, 7
        %s302 = smul.addr %s299, 8
        %s303 = sadd.s32 %s301, %s302
        %s304 = smul.addr %s303, 8
        %s305 = scalar_lea.vmem %s0, %s304
        %s306 = smul.u32 8, %s21
      $region44: #{tpu_custom_call.1} parent=39 // pred_fallthru
        _
      // Predicated region
      $region45: #{tpu_custom_call.1} parent=39 // pred_check
        %p307 = pneg %p76
      $region46: #{tpu_custom_call.1} parent=39 // pred_check_branch
        %309 = sbr.rel (%p307) target = $region48
      $region47: #{tpu_custom_call.1} parent=39 // pred_region
        %p310 = scmp.lt.s32.totalorder %s22, 1
        %s311 = scalar_select %p310, %s22, 1
        %p312 = scmp.lt.s32.totalorder %s21, 0
        %s313 = scalar_select %p312, %s21, 0
        %s314 = sadd.s32 %s313, %s311
        %s315 = smul.addr %s314, 4
        %s316 = scalar_lea.vmem %s1, %s315
      $region48: #{tpu_custom_call.1} parent=39 // pred_fallthru
        _
    $region40: #{tpu_custom_call.1} parent=5 // pred_fallthru
      _
    %p317 = scmp.le.s32.totalorder 1, %s14
    %p318 = scmp.lt.s32.totalorder %s14, 3
    %p319 = pnand %p317, %p318
    %p320 = pneg %p319
    // Predicated region
    $region49: #{tpu_custom_call.1} parent=5 // pred_check
      _
    $region50: #{tpu_custom_call.1} parent=5 // pred_check_branch
      %322 = sbr.rel (%p319) target = $region52
    $region51: #{tpu_custom_call.1} parent=5 // pred_region
      %s323 = ssub.s32 %s14, 1
      %s324 = smul.u32 8, %s23
      %p325 = scmp.lt.s32.totalorder %s24, 1
      %s326 = scalar_select %p325, %s24, 1
      %p327 = scmp.lt.s32.totalorder %s324, 7
      %s328 = scalar_select %p327, %s324, 7
      %s329 = smul.addr %s326, 8
      %s330 = sadd.s32 %s328, %s329
      %s331 = smul.addr %s330, 8
      %s332 = scalar_lea.vmem %s0, %s331
      %p333 = pneg %p54
      %p334 = pneg %p51
      %p335 = scmp.lt.s32.totalorder %s24, 1
      %s336 = scalar_select %p335, %s24, 1
      %p337 = scmp.lt.s32.totalorder %s23, 0
      %s338 = scalar_select %p337, %s23, 0
      %s339 = sadd.s32 %s338, %s336
      %s340 = smul.addr %s339, 4
      %s341 = scalar_lea.vmem %s1, %s340
      %p342 = pneg %p82
      %p343 = pneg %p79
      %p344 = scmp.lt.s32.totalorder %s23, 0
      %s345 = scalar_select %p344, %s23, 0
      %s346 = smul.addr %s345, 9
      %s347 = smul.addr %s346, 8
      %s348 = scalar_lea.vmem %s2, %s347
      %p349 = pneg %p108
      %p350 = pneg %p105
      %s351 = smul.u32 8, %s23
      %p352 = scmp.lt.s32.totalorder %s351, 7
      %s353 = scalar_select %p352, %s351, 7
      %s354 = smul.addr %s353, 8
      %s355 = scalar_lea.vmem %s3, %s354
      %p356 = pneg %p134
      %p357 = pneg %p131
      %p358 = pneg %p155
      %p359 = pneg %p152
      %p360 = pneg %p176
      %p361 = pneg %p173
      %p362 = pneg %p197
      %p363 = pneg %p194
      %p364 = pneg %p218
      %p365 = pneg %p215
      %p366 = pneg %p246
      %p367 = pneg %p243
      %s368 = smul.u32 8, %s23
      %p369 = scmp.lt.s32.totalorder %s24, 1
      %s370 = scalar_select %p369, %s24, 1
      %p371 = scmp.lt.s32.totalorder %s368, 7
      %s372 = scalar_select %p371, %s368, 7
      %s373 = smul.addr %s370, 8
      %s374 = sadd.s32 %s372, %s373
      %s375 = smul.addr %s374, 8
      %s376 = scalar_lea.vmem %s8, %s375
      %s377 = smul.u32 8, %s23
      %p378 = scmp.lt.s32.totalorder %s24, 1
      %s379 = scalar_select %p378, %s24, 1
      %p380 = scmp.lt.s32.totalorder %s377, 7
      %s381 = scalar_select %p380, %s377, 7
      %s382 = smul.addr %s379, 8
      %s383 = sadd.s32 %s381, %s382
      %s384 = smul.addr %s383, 8
      %s385 = scalar_lea.vmem %s0, %s384
      %s386 = smul.u32 8, %s23
      %p387 = scmp.lt.s32.totalorder %s24, 1
      %s388 = scalar_select %p387, %s24, 1
      %p389 = scmp.lt.s32.totalorder %s23, 0
      %s390 = scalar_select %p389, %s23, 0
      %s391 = sadd.s32 %s390, %s388
      %s392 = smul.addr %s391, 4
      %s393 = scalar_lea.vmem %s1, %s392
      %p394 = scmp.lt.s32.totalorder %s23, 0
      %s395 = scalar_select %p394, %s23, 0
      %s396 = smul.addr %s395, 9
      %s397 = smul.addr %s396, 8
      %s398 = scalar_lea.vmem %s2, %s397
      %s399 = smul.u32 8, %s23
      %p400 = scmp.lt.s32.totalorder %s399, 7
      %s401 = scalar_select %p400, %s399, 7
      %s402 = smul.addr %s401, 8
      %s403 = scalar_lea.vmem %s3, %s402
      %s404 = smul.u32 8, %s23
      %s405 = smul.u32 8, %s23
      %p406 = scmp.lt.s32.totalorder %s24, 1
      %s407 = scalar_select %p406, %s24, 1
      %p408 = scmp.lt.s32.totalorder %s405, 7
      %s409 = scalar_select %p408, %s405, 7
      %s410 = smul.addr %s407, 8
      %s411 = sadd.s32 %s409, %s410
      %s412 = smul.addr %s411, 8
      %s413 = scalar_lea.vmem %s8, %s412
      %s414 = smul.u32 8, %s23
      %v415 = vld [vmem:[%s385] sm:$0xff]
      %v416 = vld [vmem:[%s385 + $0x8] sm:$0xff]
      %v417 = vld [vmem:[%s385 + $0x10] sm:$0xff]
      %v418 = vld [vmem:[%s385 + $0x18] sm:$0xff]
      %v419 = vld [vmem:[%s385 + $0x20] sm:$0xff]
      %v420 = vld [vmem:[%s385 + $0x28] sm:$0xff]
      %v421 = vld [vmem:[%s385 + $0x30] sm:$0xff]
      %v422 = vld [vmem:[%s385 + $0x38] sm:$0xff]
      %v423 = vld [vmem:[%s393] sm:$0xf]
      %vm424 = vcmask 25600
      %425 = vst.msk [vmem:[#allocation2] sm:$0x3] %vm424, %v423
      %vm426 = vcmask 31744
      %427 = vst.msk [vmem:[#allocation2 + $0x2] sm:$0xff] %vm426, %v415
      %428 = vst.msk [vmem:[#allocation2 + $0xa] sm:$0xff] %vm426, %v416
      %429 = vst.msk [vmem:[#allocation2 + $0x12] sm:$0xff] %vm426, %v417
      %430 = vst.msk [vmem:[#allocation2 + $0x1a] sm:$0xff] %vm426, %v418
      %431 = vst.msk [vmem:[#allocation2 + $0x22] sm:$0xff] %vm426, %v419
      %432 = vst.msk [vmem:[#allocation2 + $0x2a] sm:$0xff] %vm426, %v420
      %433 = vst.msk [vmem:[#allocation2 + $0x32] sm:$0xff] %vm426, %v421
      %434 = vst.msk [vmem:[#allocation2 + $0x3a] sm:$0xff] %vm426, %v422
      %vm435 = vcmask 27650
      %436 = vst.msk [vmem:[#allocation2 + $0x40] sm:$0xc] %vm435, %v423
      %v437 = vld [vmem:[#allocation2] sm:$0xff]
      %v438 = vld [vmem:[#allocation2 + $0x8] sm:$0xff]
      %v439 = vld [vmem:[#allocation2 + $0x10] sm:$0xff]
      %v440 = vld [vmem:[#allocation2 + $0x18] sm:$0xff]
      %v441 = vld [vmem:[#allocation2 + $0x20] sm:$0xff]
      %v442 = vld [vmem:[#allocation2 + $0x28] sm:$0xff]
      %v443 = vld [vmem:[#allocation2 + $0x30] sm:$0xff]
      %v444 = vld [vmem:[#allocation2 + $0x38] sm:$0xff]
      %v445 = vld [vmem:[#allocation2 + $0x40] sm:$0x3]
      %v446 = vld [vmem:[%s4] sm:$0xf]
      %v447 = vld [vmem:[#allocation2 + $0x1] sm:$0xff]
      %v448 = vld [vmem:[#allocation2 + $0x9] sm:$0xff]
      %v449 = vld [vmem:[#allocation2 + $0x11] sm:$0xff]
      %v450 = vld [vmem:[#allocation2 + $0x19] sm:$0xff]
      %v451 = vld [vmem:[#allocation2 + $0x21] sm:$0xff]
      %v452 = vld [vmem:[#allocation2 + $0x29] sm:$0xff]
      %v453 = vld [vmem:[#allocation2 + $0x31] sm:$0xff]
      %v454 = vld [vmem:[#allocation2 + $0x39] sm:$0xff]
      %v455 = vld [vmem:[#allocation2 + $0x41] sm:$0x3]
      %s456 = scalar_lea.vmem %s4, 4
      %v457 = vld [vmem:[%s456] sm:$0xf]
      %v459 = vsel %vm426, %v447, 0
      %v462 = vsel %vm426, %v448, 0
      %v465 = vsel %vm426, %v449, 0
      %v468 = vsel %vm426, %v450, 0
      %v471 = vsel %vm426, %v451, 0
      %v474 = vsel %vm426, %v452, 0
      %v477 = vsel %vm426, %v453, 0
      %v480 = vsel %vm426, %v454, 0
      %v483 = vsel %vm426, %v455, 0
      %vm485 = vcmask 1043456
      %v487 = vsel %vm485, %v457, 0
      %489 = vmatprep.subr.mxu0 0.0
      %490 = vmatpush1.msra.mxu0 %v487
      %491 = vmatprep.subr.mxu0 0.0
      %492 = vmatpush1.msra.mxu0 0.0
      %493 = vmatprep.subr.mxu0 0.0
      %494 = vmatpush1.msra.mxu0 0.0
      %495 = vmatprep.subr.mxu0 0.0
      %496 = vmatpush1.msra.mxu0 0.0
      %497 = vmatprep.subr.mxu0 0.0
      %498 = vmatpush1.msra.mxu0 0.0
      %499 = vmatprep.subr.mxu0 0.0
      %500 = vmatpush1.msra.mxu0 0.0
      %501 = vmatprep.subr.mxu0 0.0
      %502 = vmatpush1.msra.mxu0 0.0
      %503 = vmatprep.subr.mxu0 0.0
      %504 = vmatpush1.msra.mxu0 0.0
      %505 = vmatprep.subr.mxu0 0.0
      %506 = vmatpush1.msra.mxu0 0.0
      %507 = vmatprep.subr.mxu0 0.0
      %508 = vmatpush1.msra.mxu0 0.0
      %509 = vmatprep.subr.mxu0 0.0
      %510 = vmatpush1.msra.mxu0 0.0
      %511 = vmatprep.subr.mxu0 0.0
      %512 = vmatpush1.msra.mxu0 0.0
      %513 = vmatprep.subr.mxu0 0.0
      %514 = vmatpush1.msra.mxu0 0.0
      %515 = vmatprep.subr.mxu0 0.0
      %516 = vmatpush1.msra.mxu0 0.0
      %517 = vmatprep.subr.mxu0 0.0
      %518 = vmatpush1.msra.mxu0 0.0
      %519 = vmatprep.subr.mxu0 0.0
      %520 = vmatpush1.msra.mxu0 0.0
      %521 = vmatprep.subr.mxu0 0.0
      %522 = vmatpush1.msra.mxu0 0.0
      %523 = vmatprep.subr.mxu0 0.0
      %524 = vmatpush1.msra.mxu0 0.0
      %525 = vmatprep.subr.mxu0 0.0
      %526 = vmatpush1.msra.mxu0 0.0
      %527 = vmatprep.subr.mxu0 0.0
      %528 = vmatpush1.msra.mxu0 0.0
      %529 = vmatprep.subr.mxu0 0.0
      %530 = vmatpush1.msra.mxu0 0.0
      %531 = vmatprep.subr.mxu0 0.0
      %532 = vmatpush1.msra.mxu0 0.0
      %533 = vmatprep.subr.mxu0 0.0
      %534 = vmatpush1.msra.mxu0 0.0
      %535 = vmatprep.subr.mxu0 0.0
      %536 = vmatpush1.msra.mxu0 0.0
      %537 = vmatprep.subr.mxu0 0.0
      %538 = vmatpush1.msra.mxu0 0.0
      %539 = vmatprep.subr.mxu0 0.0
      %540 = vmatpush1.msra.mxu0 0.0
      %541 = vmatprep.subr.mxu0 0.0
      %542 = vmatpush1.msra.mxu0 0.0
      %543 = vmatprep.subr.mxu0 0.0
      %544 = vmatpush1.msra.mxu0 0.0
      %545 = vmatprep.subr.mxu0 0.0
      %546 = vmatpush1.msra.mxu0 0.0
      %547 = vmatprep.subr.mxu0 0.0
      %548 = vmatpush1.msra.mxu0 0.0
      %549 = vmatprep.subr.mxu0 0.0
      %550 = vmatpush1.msra.mxu0 0.0
      %551 = vmatprep.subr.mxu0 0.0
      %552 = vmatpush1.msra.mxu0 0.0
      %553 = vmatprep.mubr.f32.mxu0 0.0
      %554 = vmatmul.mubr.f32.gmra.mrb[0].mxu0 %v459
      %v555 = vpop.f32.mrb[0].mxu0
      %v556 = vadd.f32 0.0, %v555
      %v557 = vpop.f32.mrb[0].mxu0
      %558 = vmatprep.mubr.f32.mxu0 0.0
      %559 = vmatmul.mubr.f32.gmra.mrb[0].mxu0 %v462
      %v560 = vpop.f32.mrb[0].mxu0
      %v561 = vadd.f32 0.0, %v560
      %v562 = vpop.f32.mrb[0].mxu0
      %563 = vmatprep.mubr.f32.mxu0 0.0
      %564 = vmatmul.mubr.f32.gmra.mrb[0].mxu0 %v465
      %v565 = vpop.f32.mrb[0].mxu0
      %v566 = vadd.f32 0.0, %v565
      %v567 = vpop.f32.mrb[0].mxu0
      %568 = vmatprep.mubr.f32.mxu0 0.0
      %569 = vmatmul.mubr.f32.gmra.mrb[0].mxu0 %v468
      %v570 = vpop.f32.mrb[0].mxu0
      %v571 = vadd.f32 0.0, %v570
      %v572 = vpop.f32.mrb[0].mxu0
      %573 = vmatprep.mubr.f32.mxu0 0.0
      %574 = vmatmul.mubr.f32.gmra.mrb[0].mxu0 %v471
      %v575 = vpop.f32.mrb[0].mxu0
      %v576 = vadd.f32 0.0, %v575
      %v577 = vpop.f32.mrb[0].mxu0
      %578 = vmatprep.mubr.f32.mxu0 0.0
      %579 = vmatmul.mubr.f32.gmra.mrb[0].mxu0 %v474
      %v580 = vpop.f32.mrb[0].mxu0
      %v581 = vadd.f32 0.0, %v580
      %v582 = vpop.f32.mrb[0].mxu0
      %583 = vmatprep.mubr.f32.mxu0 0.0
      %584 = vmatmul.mubr.f32.gmra.mrb[0].mxu0 %v477
      %v585 = vpop.f32.mrb[0].mxu0
      %v586 = vadd.f32 0.0, %v585
      %v587 = vpop.f32.mrb[0].mxu0
      %588 = vmatprep.mubr.f32.mxu0 0.0
      %589 = vmatmul.mubr.f32.gmra.mrb[0].mxu0 %v480
      %v590 = vpop.f32.mrb[0].mxu0
      %v591 = vadd.f32 0.0, %v590
      %v592 = vpop.f32.mrb[0].mxu0
      %593 = vmatprep.mubr.f32.mxu0 0.0
      %594 = vmatmul.mubr.f32.gmra.mrb[0].mxu0 %v483
      %v595 = vpop.f32.mrb[0].mxu0
      %v596 = vadd.f32 0.0, %v595
      %v597 = vpop.f32.mrb[0].mxu0
      %598 = vdwg.mxu0
      %v600 = vsel %vm426, %v437, 0
      %v603 = vsel %vm426, %v438, 0
      %v606 = vsel %vm426, %v439, 0
      %v609 = vsel %vm426, %v440, 0
      %v612 = vsel %vm426, %v441, 0
      %v615 = vsel %vm426, %v442, 0
      %v618 = vsel %vm426, %v443, 0
      %v621 = vsel %vm426, %v444, 0
      %v624 = vsel %vm426, %v445, 0
      %v627 = vsel %vm485, %v446, 0
      %629 = vmatprep.subr.mxu0 0.0
      %630 = vmatpush1.msra.mxu0 %v627
      %631 = vmatprep.subr.mxu0 0.0
      %632 = vmatpush1.msra.mxu0 0.0
      %633 = vmatprep.subr.mxu0 0.0
      %634 = vmatpush1.msra.mxu0 0.0
      %635 = vmatprep.subr.mxu0 0.0
      %636 = vmatpush1.msra.mxu0 0.0
      %637 = vmatprep.subr.mxu0 0.0
      %638 = vmatpush1.msra.mxu0 0.0
      %639 = vmatprep.subr.mxu0 0.0
      %640 = vmatpush1.msra.mxu0 0.0
      %641 = vmatprep.subr.mxu0 0.0
      %642 = vmatpush1.msra.mxu0 0.0
      %643 = vmatprep.subr.mxu0 0.0
      %644 = vmatpush1.msra.mxu0 0.0
      %645 = vmatprep.subr.mxu0 0.0
      %646 = vmatpush1.msra.mxu0 0.0
      %647 = vmatprep.subr.mxu0 0.0
      %648 = vmatpush1.msra.mxu0 0.0
      %649 = vmatprep.subr.mxu0 0.0
      %650 = vmatpush1.msra.mxu0 0.0
      %651 = vmatprep.subr.mxu0 0.0
      %652 = vmatpush1.msra.mxu0 0.0
      %653 = vmatprep.subr.mxu0 0.0
      %654 = vmatpush1.msra.mxu0 0.0
      %655 = vmatprep.subr.mxu0 0.0
      %656 = vmatpush1.msra.mxu0 0.0
      %657 = vmatprep.subr.mxu0 0.0
      %658 = vmatpush1.msra.mxu0 0.0
      %659 = vmatprep.subr.mxu0 0.0
      %660 = vmatpush1.msra.mxu0 0.0
      %661 = vmatprep.subr.mxu0 0.0
      %662 = vmatpush1.msra.mxu0 0.0
      %663 = vmatprep.subr.mxu0 0.0
      %664 = vmatpush1.msra.mxu0 0.0
      %665 = vmatprep.subr.mxu0 0.0
      %666 = vmatpush1.msra.mxu0 0.0
      %667 = vmatprep.subr.mxu0 0.0
      %668 = vmatpush1.msra.mxu0 0.0
      %669 = vmatprep.subr.mxu0 0.0
      %670 = vmatpush1.msra.mxu0 0.0
      %671 = vmatprep.subr.mxu0 0.0
      %672 = vmatpush1.msra.mxu0 0.0
      %673 = vmatprep.subr.mxu0 0.0
      %674 = vmatpush1.msra.mxu0 0.0
      %675 = vmatprep.subr.mxu0 0.0
      %676 = vmatpush1.msra.mxu0 0.0
      %677 = vmatprep.subr.mxu0 0.0
      %678 = vmatpush1.msra.mxu0 0.0
      %679 = vmatprep.subr.mxu0 0.0
      %680 = vmatpush1.msra.mxu0 0.0
      %681 = vmatprep.subr.mxu0 0.0
      %682 = vmatpush1.msra.mxu0 0.0
      %683 = vmatprep.subr.mxu0 0.0
      %684 = vmatpush1.msra.mxu0 0.0
      %685 = vmatprep.subr.mxu0 0.0
      %686 = vmatpush1.msra.mxu0 0.0
      %687 = vmatprep.subr.mxu0 0.0
      %688 = vmatpush1.msra.mxu0 0.0
      %689 = vmatprep.subr.mxu0 0.0
      %690 = vmatpush1.msra.mxu0 0.0
      %691 = vmatprep.subr.mxu0 0.0
      %692 = vmatpush1.msra.mxu0 0.0
      %693 = vmatprep.mubr.f32.mxu0 0.0
      %694 = vmatmul.mubr.f32.gmra.mrb[0].mxu0 %v600
      %v695 = vpop.f32.mrb[0].mxu0
      %v696 = vadd.f32 %v556, %v695
      %v697 = vpop.f32.mrb[0].mxu0
      %698 = vmatprep.mubr.f32.mxu0 0.0
      %699 = vmatmul.mubr.f32.gmra.mrb[0].mxu0 %v603
      %v700 = vpop.f32.mrb[0].mxu0
      %v701 = vadd.f32 %v561, %v700
      %v702 = vpop.f32.mrb[0].mxu0
      %703 = vmatprep.mubr.f32.mxu0 0.0
      %704 = vmatmul.mubr.f32.gmra.mrb[0].mxu0 %v606
      %v705 = vpop.f32.mrb[0].mxu0
      %v706 = vadd.f32 %v566, %v705
      %v707 = vpop.f32.mrb[0].mxu0
      %708 = vmatprep.mubr.f32.mxu0 0.0
      %709 = vmatmul.mubr.f32.gmra.mrb[0].mxu0 %v609
      %v710 = vpop.f32.mrb[0].mxu0
      %v711 = vadd.f32 %v571, %v710
      %v712 = vpop.f32.mrb[0].mxu0
      %713 = vmatprep.mubr.f32.mxu0 0.0
      %714 = vmatmul.mubr.f32.gmra.mrb[0].mxu0 %v612
      %v715 = vpop.f32.mrb[0].mxu0
      %v716 = vadd.f32 %v576, %v715
      %v717 = vpop.f32.mrb[0].mxu0
      %718 = vmatprep.mubr.f32.mxu0 0.0
      %719 = vmatmul.mubr.f32.gmra.mrb[0].mxu0 %v615
      %v720 = vpop.f32.mrb[0].mxu0
      %v721 = vadd.f32 %v581, %v720
      %v722 = vpop.f32.mrb[0].mxu0
      %723 = vmatprep.mubr.f32.mxu0 0.0
      %724 = vmatmul.mubr.f32.gmra.mrb[0].mxu0 %v618
      %v725 = vpop.f32.mrb[0].mxu0
      %v726 = vadd.f32 %v586, %v725
      %v727 = vpop.f32.mrb[0].mxu0
      %728 = vmatprep.mubr.f32.mxu0 0.0
      %729 = vmatmul.mubr.f32.gmra.mrb[0].mxu0 %v621
      %v730 = vpop.f32.mrb[0].mxu0
      %v731 = vadd.f32 %v591, %v730
      %v732 = vpop.f32.mrb[0].mxu0
      %733 = vmatprep.mubr.f32.mxu0 0.0
      %734 = vmatmul.mubr.f32.gmra.mrb[0].mxu0 %v624
      %v735 = vpop.f32.mrb[0].mxu0
      %v736 = vadd.f32 %v596, %v735
      %v737 = vpop.f32.mrb[0].mxu0
      %738 = vdwg.mxu0
      %v739 = vld [vmem:[#allocation2 + $0x2] sm:$0xff]
      %v740 = vld [vmem:[#allocation2 + $0xa] sm:$0xff]
      %v741 = vld [vmem:[#allocation2 + $0x12] sm:$0xff]
      %v742 = vld [vmem:[#allocation2 + $0x1a] sm:$0xff]
      %v743 = vld [vmem:[#allocation2 + $0x22] sm:$0xff]
      %v744 = vld [vmem:[#allocation2 + $0x2a] sm:$0xff]
      %v745 = vld [vmem:[#allocation2 + $0x32] sm:$0xff]
      %v746 = vld [vmem:[#allocation2 + $0x3a] sm:$0xff]
      %v747 = vld [vmem:[#allocation2 + $0x42] sm:$0x3]
      %s748 = scalar_lea.vmem %s4, 8
      %v749 = vld [vmem:[%s748] sm:$0xf]
      %v751 = vsel %vm426, %v739, 0
      %v754 = vsel %vm426, %v740, 0
      %v757 = vsel %vm426, %v741, 0
      %v760 = vsel %vm426, %v742, 0
      %v763 = vsel %vm426, %v743, 0
      %v766 = vsel %vm426, %v744, 0
      %v769 = vsel %vm426, %v745, 0
      %v772 = vsel %vm426, %v746, 0
      %v775 = vsel %vm426, %v747, 0
      %v778 = vsel %vm485, %v749, 0
      %780 = vmatprep.subr.mxu0 0.0
      %781 = vmatpush1.msra.mxu0 %v778
      %782 = vmatprep.subr.mxu0 0.0
      %783 = vmatpush1.msra.mxu0 0.0
      %784 = vmatprep.subr.mxu0 0.0
      %785 = vmatpush1.msra.mxu0 0.0
      %786 = vmatprep.subr.mxu0 0.0
      %787 = vmatpush1.msra.mxu0 0.0
      %788 = vmatprep.subr.mxu0 0.0
      %789 = vmatpush1.msra.mxu0 0.0
      %790 = vmatprep.subr.mxu0 0.0
      %791 = vmatpush1.msra.mxu0 0.0
      %792 = vmatprep.subr.mxu0 0.0
      %793 = vmatpush1.msra.mxu0 0.0
      %794 = vmatprep.subr.mxu0 0.0
      %795 = vmatpush1.msra.mxu0 0.0
      %796 = vmatprep.subr.mxu0 0.0
      %797 = vmatpush1.msra.mxu0 0.0
      %798 = vmatprep.subr.mxu0 0.0
      %799 = vmatpush1.msra.mxu0 0.0
      %800 = vmatprep.subr.mxu0 0.0
      %801 = vmatpush1.msra.mxu0 0.0
      %802 = vmatprep.subr.mxu0 0.0
      %803 = vmatpush1.msra.mxu0 0.0
      %804 = vmatprep.subr.mxu0 0.0
      %805 = vmatpush1.msra.mxu0 0.0
      %806 = vmatprep.subr.mxu0 0.0
      %807 = vmatpush1.msra.mxu0 0.0
      %808 = vmatprep.subr.mxu0 0.0
      %809 = vmatpush1.msra.mxu0 0.0
      %810 = vmatprep.subr.mxu0 0.0
      %811 = vmatpush1.msra.mxu0 0.0
      %812 = vmatprep.subr.mxu0 0.0
      %813 = vmatpush1.msra.mxu0 0.0
      %814 = vmatprep.subr.mxu0 0.0
      %815 = vmatpush1.msra.mxu0 0.0
      %816 = vmatprep.subr.mxu0 0.0
      %817 = vmatpush1.msra.mxu0 0.0
      %818 = vmatprep.subr.mxu0 0.0
      %819 = vmatpush1.msra.mxu0 0.0
      %820 = vmatprep.subr.mxu0 0.0
      %821 = vmatpush1.msra.mxu0 0.0
      %822 = vmatprep.subr.mxu0 0.0
      %823 = vmatpush1.msra.mxu0 0.0
      %824 = vmatprep.subr.mxu0 0.0
      %825 = vmatpush1.msra.mxu0 0.0
      %826 = vmatprep.subr.mxu0 0.0
      %827 = vmatpush1.msra.mxu0 0.0
      %828 = vmatprep.subr.mxu0 0.0
      %829 = vmatpush1.msra.mxu0 0.0
      %830 = vmatprep.subr.mxu0 0.0
      %831 = vmatpush1.msra.mxu0 0.0
      %832 = vmatprep.subr.mxu0 0.0
      %833 = vmatpush1.msra.mxu0 0.0
      %834 = vmatprep.subr.mxu0 0.0
      %835 = vmatpush1.msra.mxu0 0.0
      %836 = vmatprep.subr.mxu0 0.0
      %837 = vmatpush1.msra.mxu0 0.0
      %838 = vmatprep.subr.mxu0 0.0
      %839 = vmatpush1.msra.mxu0 0.0
      %840 = vmatprep.subr.mxu0 0.0
      %841 = vmatpush1.msra.mxu0 0.0
      %842 = vmatprep.subr.mxu0 0.0
      %843 = vmatpush1.msra.mxu0 0.0
      %844 = vmatprep.mubr.f32.mxu0 0.0
      %845 = vmatmul.mubr.f32.gmra.mrb[0].mxu0 %v751
      %v846 = vpop.f32.mrb[0].mxu0
      %v847 = vadd.f32 0.0, %v846
      %v848 = vpop.f32.mrb[0].mxu0
      %849 = vmatprep.mubr.f32.mxu0 0.0
      %850 = vmatmul.mubr.f32.gmra.mrb[0].mxu0 %v754
      %v851 = vpop.f32.mrb[0].mxu0
      %v852 = vadd.f32 0.0, %v851
      %v853 = vpop.f32.mrb[0].mxu0
      %854 = vmatprep.mubr.f32.mxu0 0.0
      %855 = vmatmul.mubr.f32.gmra.mrb[0].mxu0 %v757
      %v856 = vpop.f32.mrb[0].mxu0
      %v857 = vadd.f32 0.0, %v856
      %v858 = vpop.f32.mrb[0].mxu0
      %859 = vmatprep.mubr.f32.mxu0 0.0
      %860 = vmatmul.mubr.f32.gmra.mrb[0].mxu0 %v760
      %v861 = vpop.f32.mrb[0].mxu0
      %v862 = vadd.f32 0.0, %v861
      %v863 = vpop.f32.mrb[0].mxu0
      %864 = vmatprep.mubr.f32.mxu0 0.0
      %865 = vmatmul.mubr.f32.gmra.mrb[0].mxu0 %v763
      %v866 = vpop.f32.mrb[0].mxu0
      %v867 = vadd.f32 0.0, %v866
      %v868 = vpop.f32.mrb[0].mxu0
      %869 = vmatprep.mubr.f32.mxu0 0.0
      %870 = vmatmul.mubr.f32.gmra.mrb[0].mxu0 %v766
      %v871 = vpop.f32.mrb[0].mxu0
      %v872 = vadd.f32 0.0, %v871
      %v873 = vpop.f32.mrb[0].mxu0
      %874 = vmatprep.mubr.f32.mxu0 0.0
      %875 = vmatmul.mubr.f32.gmra.mrb[0].mxu0 %v769
      %v876 = vpop.f32.mrb[0].mxu0
      %v877 = vadd.f32 0.0, %v876
      %v878 = vpop.f32.mrb[0].mxu0
      %879 = vmatprep.mubr.f32.mxu0 0.0
      %880 = vmatmul.mubr.f32.gmra.mrb[0].mxu0 %v772
      %v881 = vpop.f32.mrb[0].mxu0
      %v882 = vadd.f32 0.0, %v881
      %v883 = vpop.f32.mrb[0].mxu0
      %884 = vmatprep.mubr.f32.mxu0 0.0
      %885 = vmatmul.mubr.f32.gmra.mrb[0].mxu0 %v775
      %v886 = vpop.f32.mrb[0].mxu0
      %v887 = vadd.f32 0.0, %v886
      %v888 = vpop.f32.mrb[0].mxu0
      %889 = vdwg.mxu0
      %v890 = vadd.f32 %v696, %v847
      %v891 = vadd.f32 %v701, %v852
      %v892 = vadd.f32 %v706, %v857
      %v893 = vadd.f32 %v711, %v862
      %v894 = vadd.f32 %v716, %v867
      %v895 = vadd.f32 %v721, %v872
      %v896 = vadd.f32 %v726, %v877
      %v897 = vadd.f32 %v731, %v882
      %v898 = vadd.f32 %v736, %v887
      %v899 = vld [vmem:[%s398] sm:$0xff]
      %v900 = vld [vmem:[%s398 + $0x8] sm:$0xff]
      %v901 = vld [vmem:[%s398 + $0x10] sm:$0xff]
      %v902 = vld [vmem:[%s398 + $0x18] sm:$0xff]
      %v903 = vld [vmem:[%s398 + $0x20] sm:$0xff]
      %v904 = vld [vmem:[%s398 + $0x28] sm:$0xff]
      %v905 = vld [vmem:[%s398 + $0x30] sm:$0xff]
      %v906 = vld [vmem:[%s398 + $0x38] sm:$0xff]
      %v907 = vld [vmem:[%s398 + $0x40] sm:$0x3]
      %v908 = vadd.f32 %v890, %v899
      %v909 = vadd.f32 %v891, %v900
      %v910 = vadd.f32 %v892, %v901
      %v911 = vadd.f32 %v893, %v902
      %v912 = vadd.f32 %v894, %v903
      %v913 = vadd.f32 %v895, %v904
      %v914 = vadd.f32 %v896, %v905
      %v915 = vadd.f32 %v897, %v906
      %v916 = vadd.f32 %v898, %v907
      %vm917 = vcmp.ge.f32.partialorder %v908, 0.0
      %vm918 = vcmp.ge.f32.partialorder %v909, 0.0
      %vm919 = vcmp.ge.f32.partialorder %v910, 0.0
      %vm920 = vcmp.ge.f32.partialorder %v911, 0.0
      %vm921 = vcmp.ge.f32.partialorder %v912, 0.0
      %vm922 = vcmp.ge.f32.partialorder %v913, 0.0
      %vm923 = vcmp.ge.f32.partialorder %v914, 0.0
      %vm924 = vcmp.ge.f32.partialorder %v915, 0.0
      %vm925 = vcmp.ge.f32.partialorder %v916, 0.0
      %v926 = vmul.f32 %v908, 0.2
      %v927 = vmul.f32 %v909, 0.2
      %v928 = vmul.f32 %v910, 0.2
      %v929 = vmul.f32 %v911, 0.2
      %v930 = vmul.f32 %v912, 0.2
      %v931 = vmul.f32 %v913, 0.2
      %v932 = vmul.f32 %v914, 0.2
      %v933 = vmul.f32 %v915, 0.2
      %v934 = vmul.f32 %v916, 0.2
      %v935 = vsel %vm917, %v908, %v926
      %v936 = vsel %vm918, %v909, %v927
      %v937 = vsel %vm919, %v910, %v928
      %v938 = vsel %vm920, %v911, %v929
      %v939 = vsel %vm921, %v912, %v930
      %v940 = vsel %vm922, %v913, %v931
      %v941 = vsel %vm923, %v914, %v932
      %v942 = vsel %vm924, %v915, %v933
      %v943 = vsel %vm925, %v916, %v934
      %944 = vst.msk [vmem:[#allocation3] sm:$0xff] %vm426, %v935
      %945 = vst.msk [vmem:[#allocation3 + $0x8] sm:$0xff] %vm426, %v936
      %946 = vst.msk [vmem:[#allocation3 + $0x10] sm:$0xff] %vm426, %v937
      %947 = vst.msk [vmem:[#allocation3 + $0x18] sm:$0xff] %vm426, %v938
      %948 = vst.msk [vmem:[#allocation3 + $0x20] sm:$0xff] %vm426, %v939
      %949 = vst.msk [vmem:[#allocation3 + $0x28] sm:$0xff] %vm426, %v940
      %950 = vst.msk [vmem:[#allocation3 + $0x30] sm:$0xff] %vm426, %v941
      %951 = vst.msk [vmem:[#allocation3 + $0x38] sm:$0xff] %vm426, %v942
      %952 = vst.msk [vmem:[#allocation3 + $0x40] sm:$0x3] %vm424, %v943
      %p953 = scmp.eq.s32.totalorder %s23, 0
      // Predicated region
      $region53: #{tpu_custom_call.1} parent=51 // pred_check
        %p954 = pneg %p953
      $region54: #{tpu_custom_call.1} parent=51 // pred_check_branch
        %956 = sbr.rel (%p954) target = $region56
      $region55: #{tpu_custom_call.1} parent=51 // pred_region
        %vm957 = vcmask 24576
        %958 = vst.msk [vmem:[#allocation3] sm:$0x1] %vm957, 0.0
        %959 = vst.msk [vmem:[#allocation3 + $0x41] sm:$0x1] %vm957, 0.0
      $region56: #{tpu_custom_call.1} parent=51 // pred_fallthru
        _
      %v960 = vld [vmem:[#allocation3] sm:$0xff]
      %v961 = vld [vmem:[#allocation3 + $0x8] sm:$0xff]
      %v962 = vld [vmem:[#allocation3 + $0x10] sm:$0xff]
      %v963 = vld [vmem:[#allocation3 + $0x18] sm:$0xff]
      %v964 = vld [vmem:[#allocation3 + $0x20] sm:$0xff]
      %v965 = vld [vmem:[#allocation3 + $0x28] sm:$0xff]
      %v966 = vld [vmem:[#allocation3 + $0x30] sm:$0xff]
      %v967 = vld [vmem:[#allocation3 + $0x38] sm:$0xff]
      %v968 = vld [vmem:[%s5] sm:$0xf]
      %v969 = vld [vmem:[#allocation3 + $0x1] sm:$0xff]
      %v970 = vld [vmem:[#allocation3 + $0x9] sm:$0xff]
      %v971 = vld [vmem:[#allocation3 + $0x11] sm:$0xff]
      %v972 = vld [vmem:[#allocation3 + $0x19] sm:$0xff]
      %v973 = vld [vmem:[#allocation3 + $0x21] sm:$0xff]
      %v974 = vld [vmem:[#allocation3 + $0x29] sm:$0xff]
      %v975 = vld [vmem:[#allocation3 + $0x31] sm:$0xff]
      %v976 = vld [vmem:[#allocation3 + $0x39] sm:$0xff]
      %s977 = scalar_lea.vmem %s5, 4
      %v978 = vld [vmem:[%s977] sm:$0xf]
      %v980 = vsel %vm426, %v969, 0
      %v983 = vsel %vm426, %v970, 0
      %v986 = vsel %vm426, %v971, 0
      %v989 = vsel %vm426, %v972, 0
      %v992 = vsel %vm426, %v973, 0
      %v995 = vsel %vm426, %v974, 0
      %v998 = vsel %vm426, %v975, 0
      %v1001 = vsel %vm426, %v976, 0
      %v1004 = vsel %vm485, %v978, 0
      %1006 = vmatprep.subr.mxu0 0.0
      %1007 = vmatpush1.msra.mxu0 %v1004
      %1008 = vmatprep.subr.mxu0 0.0
      %1009 = vmatpush1.msra.mxu0 0.0
      %1010 = vmatprep.subr.mxu0 0.0
      %1011 = vmatpush1.msra.mxu0 0.0
      %1012 = vmatprep.subr.mxu0 0.0
      %1013 = vmatpush1.msra.mxu0 0.0
      %1014 = vmatprep.subr.mxu0 0.0
      %1015 = vmatpush1.msra.mxu0 0.0
      %1016 = vmatprep.subr.mxu0 0.0
      %1017 = vmatpush1.msra.mxu0 0.0
      %1018 = vmatprep.subr.mxu0 0.0
      %1019 = vmatpush1.msra.mxu0 0.0
      %1020 = vmatprep.subr.mxu0 0.0
      %1021 = vmatpush1.msra.mxu0 0.0
      %1022 = vmatprep.subr.mxu0 0.0
      %1023 = vmatpush1.msra.mxu0 0.0
      %1024 = vmatprep.subr.mxu0 0.0
      %1025 = vmatpush1.msra.mxu0 0.0
      %1026 = vmatprep.subr.mxu0 0.0
      %1027 = vmatpush1.msra.mxu0 0.0
      %1028 = vmatprep.subr.mxu0 0.0
      %1029 = vmatpush1.msra.mxu0 0.0
      %1030 = vmatprep.subr.mxu0 0.0
      %1031 = vmatpush1.msra.mxu0 0.0
      %1032 = vmatprep.subr.mxu0 0.0
      %1033 = vmatpush1.msra.mxu0 0.0
      %1034 = vmatprep.subr.mxu0 0.0
      %1035 = vmatpush1.msra.mxu0 0.0
      %1036 = vmatprep.subr.mxu0 0.0
      %1037 = vmatpush1.msra.mxu0 0.0
      %1038 = vmatprep.subr.mxu0 0.0
      %1039 = vmatpush1.msra.mxu0 0.0
      %1040 = vmatprep.subr.mxu0 0.0
      %1041 = vmatpush1.msra.mxu0 0.0
      %1042 = vmatprep.subr.mxu0 0.0
      %1043 = vmatpush1.msra.mxu0 0.0
      %1044 = vmatprep.subr.mxu0 0.0
      %1045 = vmatpush1.msra.mxu0 0.0
      %1046 = vmatprep.subr.mxu0 0.0
      %1047 = vmatpush1.msra.mxu0 0.0
      %1048 = vmatprep.subr.mxu0 0.0
      %1049 = vmatpush1.msra.mxu0 0.0
      %1050 = vmatprep.subr.mxu0 0.0
      %1051 = vmatpush1.msra.mxu0 0.0
      %1052 = vmatprep.subr.mxu0 0.0
      %1053 = vmatpush1.msra.mxu0 0.0
      %1054 = vmatprep.subr.mxu0 0.0
      %1055 = vmatpush1.msra.mxu0 0.0
      %1056 = vmatprep.subr.mxu0 0.0
      %1057 = vmatpush1.msra.mxu0 0.0
      %1058 = vmatprep.subr.mxu0 0.0
      %1059 = vmatpush1.msra.mxu0 0.0
      %1060 = vmatprep.subr.mxu0 0.0
      %1061 = vmatpush1.msra.mxu0 0.0
      %1062 = vmatprep.subr.mxu0 0.0
      %1063 = vmatpush1.msra.mxu0 0.0
      %1064 = vmatprep.subr.mxu0 0.0
      %1065 = vmatpush1.msra.mxu0 0.0
      %1066 = vmatprep.subr.mxu0 0.0
      %1067 = vmatpush1.msra.mxu0 0.0
      %1068 = vmatprep.subr.mxu0 0.0
      %1069 = vmatpush1.msra.mxu0 0.0
      %1070 = vmatprep.mubr.f32.mxu0 0.0
      %1071 = vmatmul.mubr.f32.gmra.mrb[0].mxu0 %v980
      %v1072 = vpop.f32.mrb[0].mxu0
      %v1073 = vadd.f32 0.0, %v1072
      %v1074 = vpop.f32.mrb[0].mxu0
      %1075 = vmatprep.mubr.f32.mxu0 0.0
      %1076 = vmatmul.mubr.f32.gmra.mrb[0].mxu0 %v983
      %v1077 = vpop.f32.mrb[0].mxu0
      %v1078 = vadd.f32 0.0, %v1077
      %v1079 = vpop.f32.mrb[0].mxu0
      %1080 = vmatprep.mubr.f32.mxu0 0.0
      %1081 = vmatmul.mubr.f32.gmra.mrb[0].mxu0 %v986
      %v1082 = vpop.f32.mrb[0].mxu0
      %v1083 = vadd.f32 0.0, %v1082
      %v1084 = vpop.f32.mrb[0].mxu0
      %1085 = vmatprep.mubr.f32.mxu0 0.0
      %1086 = vmatmul.mubr.f32.gmra.mrb[0].mxu0 %v989
      %v1087 = vpop.f32.mrb[0].mxu0
      %v1088 = vadd.f32 0.0, %v1087
      %v1089 = vpop.f32.mrb[0].mxu0
      %1090 = vmatprep.mubr.f32.mxu0 0.0
      %1091 = vmatmul.mubr.f32.gmra.mrb[0].mxu0 %v992
      %v1092 = vpop.f32.mrb[0].mxu0
      %v1093 = vadd.f32 0.0, %v1092
      %v1094 = vpop.f32.mrb[0].mxu0
      %1095 = vmatprep.mubr.f32.mxu0 0.0
      %1096 = vmatmul.mubr.f32.gmra.mrb[0].mxu0 %v995
      %v1097 = vpop.f32.mrb[0].mxu0
      %v1098 = vadd.f32 0.0, %v1097
      %v1099 = vpop.f32.mrb[0].mxu0
      %1100 = vmatprep.mubr.f32.mxu0 0.0
      %1101 = vmatmul.mubr.f32.gmra.mrb[0].mxu0 %v998
      %v1102 = vpop.f32.mrb[0].mxu0
      %v1103 = vadd.f32 0.0, %v1102
      %v1104 = vpop.f32.mrb[0].mxu0
      %1105 = vmatprep.mubr.f32.mxu0 0.0
      %1106 = vmatmul.mubr.f32.gmra.mrb[0].mxu0 %v1001
      %v1107 = vpop.f32.mrb[0].mxu0
      %v1108 = vadd.f32 0.0, %v1107
      %v1109 = vpop.f32.mrb[0].mxu0
      %1110 = vdwg.mxu0
      %v1112 = vsel %vm426, %v960, 0
      %v1115 = vsel %vm426, %v961, 0
      %v1118 = vsel %vm426, %v962, 0
      %v1121 = vsel %vm426, %v963, 0
      %v1124 = vsel %vm426, %v964, 0
      %v1127 = vsel %vm426, %v965, 0
      %v1130 = vsel %vm426, %v966, 0
      %v1133 = vsel %vm426, %v967, 0
      %v1136 = vsel %vm485, %v968, 0
      %1138 = vmatprep.subr.mxu0 0.0
      %1139 = vmatpush1.msra.mxu0 %v1136
      %1140 = vmatprep.subr.mxu0 0.0
      %1141 = vmatpush1.msra.mxu0 0.0
      %1142 = vmatprep.subr.mxu0 0.0
      %1143 = vmatpush1.msra.mxu0 0.0
      %1144 = vmatprep.subr.mxu0 0.0
      %1145 = vmatpush1.msra.mxu0 0.0
      %1146 = vmatprep.subr.mxu0 0.0
      %1147 = vmatpush1.msra.mxu0 0.0
      %1148 = vmatprep.subr.mxu0 0.0
      %1149 = vmatpush1.msra.mxu0 0.0
      %1150 = vmatprep.subr.mxu0 0.0
      %1151 = vmatpush1.msra.mxu0 0.0
      %1152 = vmatprep.subr.mxu0 0.0
      %1153 = vmatpush1.msra.mxu0 0.0
      %1154 = vmatprep.subr.mxu0 0.0
      %1155 = vmatpush1.msra.mxu0 0.0
      %1156 = vmatprep.subr.mxu0 0.0
      %1157 = vmatpush1.msra.mxu0 0.0
      %1158 = vmatprep.subr.mxu0 0.0
      %1159 = vmatpush1.msra.mxu0 0.0
      %1160 = vmatprep.subr.mxu0 0.0
      %1161 = vmatpush1.msra.mxu0 0.0
      %1162 = vmatprep.subr.mxu0 0.0
      %1163 = vmatpush1.msra.mxu0 0.0
      %1164 = vmatprep.subr.mxu0 0.0
      %1165 = vmatpush1.msra.mxu0 0.0
      %1166 = vmatprep.subr.mxu0 0.0
      %1167 = vmatpush1.msra.mxu0 0.0
      %1168 = vmatprep.subr.mxu0 0.0
      %1169 = vmatpush1.msra.mxu0 0.0
      %1170 = vmatprep.subr.mxu0 0.0
      %1171 = vmatpush1.msra.mxu0 0.0
      %1172 = vmatprep.subr.mxu0 0.0
      %1173 = vmatpush1.msra.mxu0 0.0
      %1174 = vmatprep.subr.mxu0 0.0
      %1175 = vmatpush1.msra.mxu0 0.0
      %1176 = vmatprep.subr.mxu0 0.0
      %1177 = vmatpush1.msra.mxu0 0.0
      %1178 = vmatprep.subr.mxu0 0.0
      %1179 = vmatpush1.msra.mxu0 0.0
      %1180 = vmatprep.subr.mxu0 0.0
      %1181 = vmatpush1.msra.mxu0 0.0
      %1182 = vmatprep.subr.mxu0 0.0
      %1183 = vmatpush1.msra.mxu0 0.0
      %1184 = vmatprep.subr.mxu0 0.0
      %1185 = vmatpush1.msra.mxu0 0.0
      %1186 = vmatprep.subr.mxu0 0.0
      %1187 = vmatpush1.msra.mxu0 0.0
      %1188 = vmatprep.subr.mxu0 0.0
      %1189 = vmatpush1.msra.mxu0 0.0
      %1190 = vmatprep.subr.mxu0 0.0
      %1191 = vmatpush1.msra.mxu0 0.0
      %1192 = vmatprep.subr.mxu0 0.0
      %1193 = vmatpush1.msra.mxu0 0.0
      %1194 = vmatprep.subr.mxu0 0.0
      %1195 = vmatpush1.msra.mxu0 0.0
      %1196 = vmatprep.subr.mxu0 0.0
      %1197 = vmatpush1.msra.mxu0 0.0
      %1198 = vmatprep.subr.mxu0 0.0
      %1199 = vmatpush1.msra.mxu0 0.0
      %1200 = vmatprep.subr.mxu0 0.0
      %1201 = vmatpush1.msra.mxu0 0.0
      %1202 = vmatprep.mubr.f32.mxu0 0.0
      %1203 = vmatmul.mubr.f32.gmra.mrb[0].mxu0 %v1112
      %v1204 = vpop.f32.mrb[0].mxu0
      %v1205 = vadd.f32 %v1073, %v1204
      %v1206 = vpop.f32.mrb[0].mxu0
      %1207 = vmatprep.mubr.f32.mxu0 0.0
      %1208 = vmatmul.mubr.f32.gmra.mrb[0].mxu0 %v1115
      %v1209 = vpop.f32.mrb[0].mxu0
      %v1210 = vadd.f32 %v1078, %v1209
      %v1211 = vpop.f32.mrb[0].mxu0
      %1212 = vmatprep.mubr.f32.mxu0 0.0
      %1213 = vmatmul.mubr.f32.gmra.mrb[0].mxu0 %v1118
      %v1214 = vpop.f32.mrb[0].mxu0
      %v1215 = vadd.f32 %v1083, %v1214
      %v1216 = vpop.f32.mrb[0].mxu0
      %1217 = vmatprep.mubr.f32.mxu0 0.0
      %1218 = vmatmul.mubr.f32.gmra.mrb[0].mxu0 %v1121
      %v1219 = vpop.f32.mrb[0].mxu0
      %v1220 = vadd.f32 %v1088, %v1219
      %v1221 = vpop.f32.mrb[0].mxu0
      %1222 = vmatprep.mubr.f32.mxu0 0.0
      %1223 = vmatmul.mubr.f32.gmra.mrb[0].mxu0 %v1124
      %v1224 = vpop.f32.mrb[0].mxu0
      %v1225 = vadd.f32 %v1093, %v1224
      %v1226 = vpop.f32.mrb[0].mxu0
      %1227 = vmatprep.mubr.f32.mxu0 0.0
      %1228 = vmatmul.mubr.f32.gmra.mrb[0].mxu0 %v1127
      %v1229 = vpop.f32.mrb[0].mxu0
      %v1230 = vadd.f32 %v1098, %v1229
      %v1231 = vpop.f32.mrb[0].mxu0
      %1232 = vmatprep.mubr.f32.mxu0 0.0
      %1233 = vmatmul.mubr.f32.gmra.mrb[0].mxu0 %v1130
      %v1234 = vpop.f32.mrb[0].mxu0
      %v1235 = vadd.f32 %v1103, %v1234
      %v1236 = vpop.f32.mrb[0].mxu0
      %1237 = vmatprep.mubr.f32.mxu0 0.0
      %1238 = vmatmul.mubr.f32.gmra.mrb[0].mxu0 %v1133
      %v1239 = vpop.f32.mrb[0].mxu0
      %v1240 = vadd.f32 %v1108, %v1239
      %v1241 = vpop.f32.mrb[0].mxu0
      %1242 = vdwg.mxu0
      %v1243 = vld [vmem:[#allocation3 + $0x2] sm:$0xff]
      %v1244 = vld [vmem:[#allocation3 + $0xa] sm:$0xff]
      %v1245 = vld [vmem:[#allocation3 + $0x12] sm:$0xff]
      %v1246 = vld [vmem:[#allocation3 + $0x1a] sm:$0xff]
      %v1247 = vld [vmem:[#allocation3 + $0x22] sm:$0xff]
      %v1248 = vld [vmem:[#allocation3 + $0x2a] sm:$0xff]
      %v1249 = vld [vmem:[#allocation3 + $0x32] sm:$0xff]
      %v1250 = vld [vmem:[#allocation3 + $0x3a] sm:$0xff]
      %s1251 = scalar_lea.vmem %s5, 8
      %v1252 = vld [vmem:[%s1251] sm:$0xf]
      %v1254 = vsel %vm426, %v1243, 0
      %v1257 = vsel %vm426, %v1244, 0
      %v1260 = vsel %vm426, %v1245, 0
      %v1263 = vsel %vm426, %v1246, 0
      %v1266 = vsel %vm426, %v1247, 0
      %v1269 = vsel %vm426, %v1248, 0
      %v1272 = vsel %vm426, %v1249, 0
      %v1275 = vsel %vm426, %v1250, 0
      %v1278 = vsel %vm485, %v1252, 0
      %1280 = vmatprep.subr.mxu0 0.0
      %1281 = vmatpush1.msra.mxu0 %v1278
      %1282 = vmatprep.subr.mxu0 0.0
      %1283 = vmatpush1.msra.mxu0 0.0
      %1284 = vmatprep.subr.mxu0 0.0
      %1285 = vmatpush1.msra.mxu0 0.0
      %1286 = vmatprep.subr.mxu0 0.0
      %1287 = vmatpush1.msra.mxu0 0.0
      %1288 = vmatprep.subr.mxu0 0.0
      %1289 = vmatpush1.msra.mxu0 0.0
      %1290 = vmatprep.subr.mxu0 0.0
      %1291 = vmatpush1.msra.mxu0 0.0
      %1292 = vmatprep.subr.mxu0 0.0
      %1293 = vmatpush1.msra.mxu0 0.0
      %1294 = vmatprep.subr.mxu0 0.0
      %1295 = vmatpush1.msra.mxu0 0.0
      %1296 = vmatprep.subr.mxu0 0.0
      %1297 = vmatpush1.msra.mxu0 0.0
      %1298 = vmatprep.subr.mxu0 0.0
      %1299 = vmatpush1.msra.mxu0 0.0
      %1300 = vmatprep.subr.mxu0 0.0
      %1301 = vmatpush1.msra.mxu0 0.0
      %1302 = vmatprep.subr.mxu0 0.0
      %1303 = vmatpush1.msra.mxu0 0.0
      %1304 = vmatprep.subr.mxu0 0.0
      %1305 = vmatpush1.msra.mxu0 0.0
      %1306 = vmatprep.subr.mxu0 0.0
      %1307 = vmatpush1.msra.mxu0 0.0
      %1308 = vmatprep.subr.mxu0 0.0
      %1309 = vmatpush1.msra.mxu0 0.0
      %1310 = vmatprep.subr.mxu0 0.0
      %1311 = vmatpush1.msra.mxu0 0.0
      %1312 = vmatprep.subr.mxu0 0.0
      %1313 = vmatpush1.msra.mxu0 0.0
      %1314 = vmatprep.subr.mxu0 0.0
      %1315 = vmatpush1.msra.mxu0 0.0
      %1316 = vmatprep.subr.mxu0 0.0
      %1317 = vmatpush1.msra.mxu0 0.0
      %1318 = vmatprep.subr.mxu0 0.0
      %1319 = vmatpush1.msra.mxu0 0.0
      %1320 = vmatprep.subr.mxu0 0.0
      %1321 = vmatpush1.msra.mxu0 0.0
      %1322 = vmatprep.subr.mxu0 0.0
      %1323 = vmatpush1.msra.mxu0 0.0
      %1324 = vmatprep.subr.mxu0 0.0
      %1325 = vmatpush1.msra.mxu0 0.0
      %1326 = vmatprep.subr.mxu0 0.0
      %1327 = vmatpush1.msra.mxu0 0.0
      %1328 = vmatprep.subr.mxu0 0.0
      %1329 = vmatpush1.msra.mxu0 0.0
      %1330 = vmatprep.subr.mxu0 0.0
      %1331 = vmatpush1.msra.mxu0 0.0
      %1332 = vmatprep.subr.mxu0 0.0
      %1333 = vmatpush1.msra.mxu0 0.0
      %1334 = vmatprep.subr.mxu0 0.0
      %1335 = vmatpush1.msra.mxu0 0.0
      %1336 = vmatprep.subr.mxu0 0.0
      %1337 = vmatpush1.msra.mxu0 0.0
      %1338 = vmatprep.subr.mxu0 0.0
      %1339 = vmatpush1.msra.mxu0 0.0
      %1340 = vmatprep.subr.mxu0 0.0
      %1341 = vmatpush1.msra.mxu0 0.0
      %1342 = vmatprep.subr.mxu0 0.0
      %1343 = vmatpush1.msra.mxu0 0.0
      %1344 = vmatprep.mubr.f32.mxu0 0.0
      %1345 = vmatmul.mubr.f32.gmra.mrb[0].mxu0 %v1254
      %v1346 = vpop.f32.mrb[0].mxu0
      %v1347 = vadd.f32 0.0, %v1346
      %v1348 = vpop.f32.mrb[0].mxu0
      %1349 = vmatprep.mubr.f32.mxu0 0.0
      %1350 = vmatmul.mubr.f32.gmra.mrb[0].mxu0 %v1257
      %v1351 = vpop.f32.mrb[0].mxu0
      %v1352 = vadd.f32 0.0, %v1351
      %v1353 = vpop.f32.mrb[0].mxu0
      %1354 = vmatprep.mubr.f32.mxu0 0.0
      %1355 = vmatmul.mubr.f32.gmra.mrb[0].mxu0 %v1260
      %v1356 = vpop.f32.mrb[0].mxu0
      %v1357 = vadd.f32 0.0, %v1356
      %v1358 = vpop.f32.mrb[0].mxu0
      %1359 = vmatprep.mubr.f32.mxu0 0.0
      %1360 = vmatmul.mubr.f32.gmra.mrb[0].mxu0 %v1263
      %v1361 = vpop.f32.mrb[0].mxu0
      %v1362 = vadd.f32 0.0, %v1361
      %v1363 = vpop.f32.mrb[0].mxu0
      %1364 = vmatprep.mubr.f32.mxu0 0.0
      %1365 = vmatmul.mubr.f32.gmra.mrb[0].mxu0 %v1266
      %v1366 = vpop.f32.mrb[0].mxu0
      %v1367 = vadd.f32 0.0, %v1366
      %v1368 = vpop.f32.mrb[0].mxu0
      %1369 = vmatprep.mubr.f32.mxu0 0.0
      %1370 = vmatmul.mubr.f32.gmra.mrb[0].mxu0 %v1269
      %v1371 = vpop.f32.mrb[0].mxu0
      %v1372 = vadd.f32 0.0, %v1371
      %v1373 = vpop.f32.mrb[0].mxu0
      %1374 = vmatprep.mubr.f32.mxu0 0.0
      %1375 = vmatmul.mubr.f32.gmra.mrb[0].mxu0 %v1272
      %v1376 = vpop.f32.mrb[0].mxu0
      %v1377 = vadd.f32 0.0, %v1376
      %v1378 = vpop.f32.mrb[0].mxu0
      %1379 = vmatprep.mubr.f32.mxu0 0.0
      %1380 = vmatmul.mubr.f32.gmra.mrb[0].mxu0 %v1275
      %v1381 = vpop.f32.mrb[0].mxu0
      %v1382 = vadd.f32 0.0, %v1381
      %v1383 = vpop.f32.mrb[0].mxu0
      %1384 = vdwg.mxu0
      %v1385 = vadd.f32 %v1205, %v1347
      %v1386 = vadd.f32 %v1210, %v1352
      %v1387 = vadd.f32 %v1215, %v1357
      %v1388 = vadd.f32 %v1220, %v1362
      %v1389 = vadd.f32 %v1225, %v1367
      %v1390 = vadd.f32 %v1230, %v1372
      %v1391 = vadd.f32 %v1235, %v1377
      %v1392 = vadd.f32 %v1240, %v1382
      %v1393 = vld [vmem:[%s403] sm:$0xff]
      %v1394 = vld [vmem:[%s403 + $0x8] sm:$0xff]
      %v1395 = vld [vmem:[%s403 + $0x10] sm:$0xff]
      %v1396 = vld [vmem:[%s403 + $0x18] sm:$0xff]
      %v1397 = vld [vmem:[%s403 + $0x20] sm:$0xff]
      %v1398 = vld [vmem:[%s403 + $0x28] sm:$0xff]
      %v1399 = vld [vmem:[%s403 + $0x30] sm:$0xff]
      %v1400 = vld [vmem:[%s403 + $0x38] sm:$0xff]
      %v1401 = vadd.f32 %v1385, %v1393
      %v1402 = vadd.f32 %v1386, %v1394
      %v1403 = vadd.f32 %v1387, %v1395
      %v1404 = vadd.f32 %v1388, %v1396
      %v1405 = vadd.f32 %v1389, %v1397
      %v1406 = vadd.f32 %v1390, %v1398
      %v1407 = vadd.f32 %v1391, %v1399
      %v1408 = vadd.f32 %v1392, %v1400
      %vm1409 = vcmp.ge.f32.partialorder %v1401, 0.0
      %vm1410 = vcmp.ge.f32.partialorder %v1402, 0.0
      %vm1411 = vcmp.ge.f32.partialorder %v1403, 0.0
      %vm1412 = vcmp.ge.f32.partialorder %v1404, 0.0
      %vm1413 = vcmp.ge.f32.partialorder %v1405, 0.0
      %vm1414 = vcmp.ge.f32.partialorder %v1406, 0.0
      %vm1415 = vcmp.ge.f32.partialorder %v1407, 0.0
      %vm1416 = vcmp.ge.f32.partialorder %v1408, 0.0
      %v1417 = vmul.f32 %v1401, 0.2
      %v1418 = vmul.f32 %v1402, 0.2
      %v1419 = vmul.f32 %v1403, 0.2
      %v1420 = vmul.f32 %v1404, 0.2
      %v1421 = vmul.f32 %v1405, 0.2
      %v1422 = vmul.f32 %v1406, 0.2
      %v1423 = vmul.f32 %v1407, 0.2
      %v1424 = vmul.f32 %v1408, 0.2
      %v1425 = vsel %vm1409, %v1401, %v1417
      %v1426 = vsel %vm1410, %v1402, %v1418
      %v1427 = vsel %vm1411, %v1403, %v1419
      %v1428 = vsel %vm1412, %v1404, %v1420
      %v1429 = vsel %vm1413, %v1405, %v1421
      %v1430 = vsel %vm1414, %v1406, %v1422
      %v1431 = vsel %vm1415, %v1407, %v1423
      %v1432 = vsel %vm1416, %v1408, %v1424
      %v1433 = vld [vmem:[%s6] sm:$0xf]
      %v1434 = vld [vmem:[%s7] sm:$0x1]
      %v1436 = vlaneseq
      %v1437 = vshrl.u32 %v1436, 7
      %v1438 = vsub.s32 0, %v1437
      %v1439 = vrot.slane %v1434, %v1438
      %v1442 = vsel %vm426, %v415, 0
      %v1445 = vsel %vm426, %v416, 0
      %v1448 = vsel %vm426, %v417, 0
      %v1451 = vsel %vm426, %v418, 0
      %v1454 = vsel %vm426, %v419, 0
      %v1457 = vsel %vm426, %v420, 0
      %v1460 = vsel %vm426, %v421, 0
      %v1463 = vsel %vm426, %v422, 0
      %v1466 = vsel %vm485, %v1433, 0
      %1468 = vmatprep.subr.mxu0 0.0
      %1469 = vmatpush1.msra.mxu0 %v1466
      %1470 = vmatprep.subr.mxu0 0.0
      %1471 = vmatpush1.msra.mxu0 0.0
      %1472 = vmatprep.subr.mxu0 0.0
      %1473 = vmatpush1.msra.mxu0 0.0
      %1474 = vmatprep.subr.mxu0 0.0
      %1475 = vmatpush1.msra.mxu0 0.0
      %1476 = vmatprep.subr.mxu0 0.0
      %1477 = vmatpush1.msra.mxu0 0.0
      %1478 = vmatprep.subr.mxu0 0.0
      %1479 = vmatpush1.msra.mxu0 0.0
      %1480 = vmatprep.subr.mxu0 0.0
      %1481 = vmatpush1.msra.mxu0 0.0
      %1482 = vmatprep.subr.mxu0 0.0
      %1483 = vmatpush1.msra.mxu0 0.0
      %1484 = vmatprep.subr.mxu0 0.0
      %1485 = vmatpush1.msra.mxu0 0.0
      %1486 = vmatprep.subr.mxu0 0.0
      %1487 = vmatpush1.msra.mxu0 0.0
      %1488 = vmatprep.subr.mxu0 0.0
      %1489 = vmatpush1.msra.mxu0 0.0
      %1490 = vmatprep.subr.mxu0 0.0
      %1491 = vmatpush1.msra.mxu0 0.0
      %1492 = vmatprep.subr.mxu0 0.0
      %1493 = vmatpush1.msra.mxu0 0.0
      %1494 = vmatprep.subr.mxu0 0.0
      %1495 = vmatpush1.msra.mxu0 0.0
      %1496 = vmatprep.subr.mxu0 0.0
      %1497 = vmatpush1.msra.mxu0 0.0
      %1498 = vmatprep.subr.mxu0 0.0
      %1499 = vmatpush1.msra.mxu0 0.0
      %1500 = vmatprep.subr.mxu0 0.0
      %1501 = vmatpush1.msra.mxu0 0.0
      %1502 = vmatprep.subr.mxu0 0.0
      %1503 = vmatpush1.msra.mxu0 0.0
      %1504 = vmatprep.subr.mxu0 0.0
      %1505 = vmatpush1.msra.mxu0 0.0
      %1506 = vmatprep.subr.mxu0 0.0
      %1507 = vmatpush1.msra.mxu0 0.0
      %1508 = vmatprep.subr.mxu0 0.0
      %1509 = vmatpush1.msra.mxu0 0.0
      %1510 = vmatprep.subr.mxu0 0.0
      %1511 = vmatpush1.msra.mxu0 0.0
      %1512 = vmatprep.subr.mxu0 0.0
      %1513 = vmatpush1.msra.mxu0 0.0
      %1514 = vmatprep.subr.mxu0 0.0
      %1515 = vmatpush1.msra.mxu0 0.0
      %1516 = vmatprep.subr.mxu0 0.0
      %1517 = vmatpush1.msra.mxu0 0.0
      %1518 = vmatprep.subr.mxu0 0.0
      %1519 = vmatpush1.msra.mxu0 0.0
      %1520 = vmatprep.subr.mxu0 0.0
      %1521 = vmatpush1.msra.mxu0 0.0
      %1522 = vmatprep.subr.mxu0 0.0
      %1523 = vmatpush1.msra.mxu0 0.0
      %1524 = vmatprep.subr.mxu0 0.0
      %1525 = vmatpush1.msra.mxu0 0.0
      %1526 = vmatprep.subr.mxu0 0.0
      %1527 = vmatpush1.msra.mxu0 0.0
      %1528 = vmatprep.subr.mxu0 0.0
      %1529 = vmatpush1.msra.mxu0 0.0
      %1530 = vmatprep.subr.mxu0 0.0
      %1531 = vmatpush1.msra.mxu0 0.0
      %1532 = vmatprep.mubr.f32.mxu0 0.0
      %1533 = vmatmul.mubr.f32.gmra.mrb[0].mxu0 %v1442
      %v1534 = vpop.f32.mrb[0].mxu0
      %v1535 = vadd.f32 %v1439, %v1534
      %v1536 = vpop.f32.mrb[0].mxu0
      %1537 = vmatprep.mubr.f32.mxu0 0.0
      %1538 = vmatmul.mubr.f32.gmra.mrb[0].mxu0 %v1445
      %v1539 = vpop.f32.mrb[0].mxu0
      %v1540 = vadd.f32 %v1439, %v1539
      %v1541 = vpop.f32.mrb[0].mxu0
      %1542 = vmatprep.mubr.f32.mxu0 0.0
      %1543 = vmatmul.mubr.f32.gmra.mrb[0].mxu0 %v1448
      %v1544 = vpop.f32.mrb[0].mxu0
      %v1545 = vadd.f32 %v1439, %v1544
      %v1546 = vpop.f32.mrb[0].mxu0
      %1547 = vmatprep.mubr.f32.mxu0 0.0
      %1548 = vmatmul.mubr.f32.gmra.mrb[0].mxu0 %v1451
      %v1549 = vpop.f32.mrb[0].mxu0
      %v1550 = vadd.f32 %v1439, %v1549
      %v1551 = vpop.f32.mrb[0].mxu0
      %1552 = vmatprep.mubr.f32.mxu0 0.0
      %1553 = vmatmul.mubr.f32.gmra.mrb[0].mxu0 %v1454
      %v1554 = vpop.f32.mrb[0].mxu0
      %v1555 = vadd.f32 %v1439, %v1554
      %v1556 = vpop.f32.mrb[0].mxu0
      %1557 = vmatprep.mubr.f32.mxu0 0.0
      %1558 = vmatmul.mubr.f32.gmra.mrb[0].mxu0 %v1457
      %v1559 = vpop.f32.mrb[0].mxu0
      %v1560 = vadd.f32 %v1439, %v1559
      %v1561 = vpop.f32.mrb[0].mxu0
      %1562 = vmatprep.mubr.f32.mxu0 0.0
      %1563 = vmatmul.mubr.f32.gmra.mrb[0].mxu0 %v1460
      %v1564 = vpop.f32.mrb[0].mxu0
      %v1565 = vadd.f32 %v1439, %v1564
      %v1566 = vpop.f32.mrb[0].mxu0
      %1567 = vmatprep.mubr.f32.mxu0 0.0
      %1568 = vmatmul.mubr.f32.gmra.mrb[0].mxu0 %v1463
      %v1569 = vpop.f32.mrb[0].mxu0
      %v1570 = vadd.f32 %v1439, %v1569
      %v1571 = vpop.f32.mrb[0].mxu0
      %1572 = vdwg.mxu0
      %v1573 = vadd.f32 %v1425, %v1535
      %v1574 = vadd.f32 %v1426, %v1540
      %v1575 = vadd.f32 %v1427, %v1545
      %v1576 = vadd.f32 %v1428, %v1550
      %v1577 = vadd.f32 %v1429, %v1555
      %v1578 = vadd.f32 %v1430, %v1560
      %v1579 = vadd.f32 %v1431, %v1565
      %v1580 = vadd.f32 %v1432, %v1570
      %vm1581 = vcmask 64512
      %1582 = vst.msk [vmem:[%s413] sm:$0xff] %vm1581, %v1573
      %1583 = vst.msk [vmem:[%s413 + $0x8] sm:$0xff] %vm1581, %v1574
      %1584 = vst.msk [vmem:[%s413 + $0x10] sm:$0xff] %vm1581, %v1575
      %1585 = vst.msk [vmem:[%s413 + $0x18] sm:$0xff] %vm1581, %v1576
      %1586 = vst.msk [vmem:[%s413 + $0x20] sm:$0xff] %vm1581, %v1577
      %1587 = vst.msk [vmem:[%s413 + $0x28] sm:$0xff] %vm1581, %v1578
      %1588 = vst.msk [vmem:[%s413 + $0x30] sm:$0xff] %vm1581, %v1579
      %1589 = vst.msk [vmem:[%s413 + $0x38] sm:$0xff] %vm1581, %v1580
      %s1590 = smul.u32 8, %s23
      %p1591 = scmp.lt.s32.totalorder %s24, 1
      %s1592 = scalar_select %p1591, %s24, 1
      %p1593 = scmp.lt.s32.totalorder %s1590, 7
      %s1594 = scalar_select %p1593, %s1590, 7
      %s1595 = smul.addr %s1592, 8
      %s1596 = sadd.s32 %s1594, %s1595
      %s1597 = smul.addr %s1596, 8
      %s1598 = scalar_lea.vmem %s8, %s1597
      // Predicated region
      $region57: #{tpu_custom_call.1} parent=51 // pred_check
        %p1599 = pneg %p243
      $region58: #{tpu_custom_call.1} parent=51 // pred_check_branch
        %1601 = sbr.rel (%p1599) target = $region60
      $region59: #{tpu_custom_call.1} parent=51 // pred_region
        %s1602 = smul.u32 8, %s23
      $region60: #{tpu_custom_call.1} parent=51 // pred_fallthru
        _
    $region52: #{tpu_custom_call.1} parent=5 // pred_fallthru
      _
    %p1603 = scmp.le.s32.totalorder 2, %s14
    // Predicated region
    $region61: #{tpu_custom_call.1} parent=5 // pred_check
      %p1604 = pneg %p1603
    $region62: #{tpu_custom_call.1} parent=5 // pred_check_branch
      %1606 = sbr.rel (%p1604) target = $region64
    $region63: #{tpu_custom_call.1} parent=5 // pred_region
      %s1607 = ssub.s32 %s14, 2
      // Predicated region
      $region65: #{tpu_custom_call.1} parent=63 // pred_check
        %p1608 = pneg %p249
      $region66: #{tpu_custom_call.1} parent=63 // pred_check_branch
        %1610 = sbr.rel (%p1608) target = $region68
      $region67: #{tpu_custom_call.1} parent=63 // pred_region
        %s1611 = smul.u32 8, %s25
        %p1612 = scmp.lt.s32.totalorder %s26, 1
        %s1613 = scalar_select %p1612, %s26, 1
        %p1614 = scmp.lt.s32.totalorder %s1611, 7
        %s1615 = scalar_select %p1614, %s1611, 7
        %s1616 = smul.addr %s1613, 8
        %s1617 = sadd.s32 %s1615, %s1616
        %s1618 = smul.addr %s1617, 8
        %s1619 = scalar_lea.vmem %s8, %s1618
      $region68: #{tpu_custom_call.1} parent=63 // pred_fallthru
        _
    $region64: #{tpu_custom_call.1} parent=5 // pred_fallthru
      _
  $region6: #{tpu_custom_call.1} parent=0 // loop_footer
    %s18 = sadd.s32 1, %s14
  $region7: #{tpu_custom_call.1} parent=0 // loop_footer_branch
    %13 = sbr.rel target = $region3
  $region8: #{tpu_custom_call.1} parent=0 // loop_exit
    _

</llo_original>
